<compile_context>
chip_gen: v6e
topology: v6e:2x2x1
jax: 0.10.0
libtpu: 0.0.40
codegen_flags: <defaults>
</compile_context>

<pallas_src>
import functools

import jax
import jax.numpy as jnp
from jax.experimental import pallas as pl
from jax.experimental.pallas import tpu as pltpu


def _se_conv_kernel(x_ref, masks_ref, w1_ref, b1_ref, w2_ref, b2_ref,
                    wc_ref, bc_ref, o_ref, *, C, Co, Cmid, H, W, SUB):
    # x_ref    : (block_rows, C*HW)   VMEM, lane-dense activations
    # masks_ref: (9, HW)              VMEM, f32 0/1 boundary masks (grid-invariant)
    # w1_ref   : (C*Cmid,)            SMEM   b1_ref: (Cmid,) SMEM
    # w2_ref   : (Cmid*C,)            SMEM   b2_ref: (C,)    SMEM
    # wc_ref   : (9*C*Co,)            SMEM   HWIO conv weights, row-major flattened
    # bc_ref   : (Co,)                SMEM   conv bias
    # o_ref    : (block_rows, Co*HW)  VMEM, lane-dense output
    HW = H * W
    block_rows = x_ref.shape[0]
    n_sub = block_rows // SUB
    inv_hw = 1.0 / float(HW)

    # Hoisted once per grid step (masks themselves are DMA'd only once thanks to
    # the constant index_map).  (1, HW) slices broadcast over the 8 sublane rows.
    masks = [masks_ref[pl.ds(t, 1), :] for t in range(9)]

    def sub_body(i, carry):
        row = pl.multiple_of(i * SUB, SUB)

        # ---- per-channel lane-dense activations for this 8-row sub-batch.
        xs = [x_ref[pl.ds(row, SUB), pl.ds(c * HW, HW)].astype(jnp.float32)
              for c in range(C)]

        # ---- squeeze: global average pool -> (SUB, 1) per channel (XLU reduce).
        means = [jnp.sum(xs[c], axis=-1, keepdims=True) * inv_hw
                 for c in range(C)]

        # ---- excitation: Linear -> ReLU -> Linear -> Sigmoid on the VPU.
        #      (C/Cmid are tiny; weights are cheap SMEM scalar reads — no MXU.)
        h1 = []
        for j in range(Cmid):
            t = means[0] * w1_ref[0 * Cmid + j]
            for c in range(1, C):
                t = t + means[c] * w1_ref[c * Cmid + j]
            h1.append(jnp.maximum(t + b1_ref[j], 0.0))
        gates = []
        for c in range(C):
            t = h1[0] * w2_ref[0 * C + c]
            for j in range(1, Cmid):
                t = t + h1[j] * w2_ref[j * C + c]
            gates.append(jax.nn.sigmoid(t + b2_ref[c]))          # (SUB, 1)

        # ---- 3x3 SAME conv as roll + mask + scalar*vector FMAs on the VPU.
        #      Accumulators start at the conv bias (saves Co adds at the end).
        acc = [jnp.full((SUB, HW), bc_ref[o], jnp.float32) for o in range(Co)]
        for c in range(C):
            xc = xs[c]
            part = [None] * Co            # per-input-channel tap partial sums
            for kh in range(3):
                dh = kh - 1
                for kw in range(3):
                    dw = kw - 1
                    tap = kh * 3 + kw
                    d = dh * W + dw       # flattened HW offset of this tap
                    if d == 0:
                        r = xc            # centre tap: no shift, no mask
                    else:
                        r = pltpu.roll(xc, shift=(-d) % HW, axis=1) * masks[tap]
                    base = (tap * C + c) * Co
                    for o in range(Co):
                        term = wc_ref[base + o] * r
                        part[o] = term if part[o] is None else part[o] + term
            # Apply the SE gate once per input channel when it closes: the
            # squeeze->excite->sigmoid chain stays off the tap-FMA critical path.
            g = gates[c]
            for o in range(Co):
                acc[o] = acc[o] + g * part[o]

        # ---- lane-dense stores (lane offsets are multiples of 128 -> clean vst).
        for o in range(Co):
            o_ref[pl.ds(row, SUB), pl.ds(o * HW, HW)] = acc[o].astype(o_ref.dtype)
        return carry

    jax.lax.fori_loop(0, n_sub, sub_body, 0)


def _boundary_masks(H, W):
    """(9, H*W) f32 0/1 masks for the 9 taps of a 3x3 SAME (zero-padded) conv."""
    HW = H * W
    col = jnp.arange(HW, dtype=jnp.int32)
    h_i = col // W
    w_i = col % W
    rows = []
    for kh in range(3):
        dh = kh - 1
        for kw in range(3):
            dw = kw - 1
            ok = ((h_i + dh >= 0) & (h_i + dh < H) &
                  (w_i + dw >= 0) & (w_i + dw < W))
            rows.append(ok.astype(jnp.float32))
    return jnp.stack(rows)


def se_layer_forward(x_nchw, params, *, max_rows_per_block=256):
    """x_nchw: (B, C, H, W). Returns (B, Co, H, W), matching the PyTorch module."""
    w1, b1, w2, b2, wc, bc = (params["w1"], params["b1"], params["w2"],
                              params["b2"], params["wc"], params["bc"])
    B, C, H, W = x_nchw.shape
    Co = wc.shape[-1]
    Cmid = w1.shape[-1]
    HW = H * W

    SUB = 8                                   # in-kernel compute sub-tile (sublanes)
    n_sub = pl.cdiv(B, SUB)                   # 8-row sub-tiles after padding
    sub_per_block = min(n_sub, max(1, max_rows_per_block // SUB))
    if n_sub > 1 and sub_per_block == n_sub:
        # v7x has 2 TensorCores: keep >= 2 grid steps when there's enough batch.
        sub_per_block = pl.cdiv(n_sub, 2)
    block_rows = sub_per_block * SUB
    n_blocks = pl.cdiv(n_sub, sub_per_block)
    B_pad = n_blocks * block_rows

    x_flat = x_nchw.reshape(B, C * HW)        # free reshape, lane-dense channels
    if B_pad != B:
        x_flat = jnp.pad(x_flat, ((0, B_pad - B), (0, 0)))

    masks = _boundary_masks(H, W)             # constant-folds under jit

    out_flat = pl.pallas_call(
        functools.partial(_se_conv_kernel, C=C, Co=Co, Cmid=Cmid,
                          H=H, W=W, SUB=SUB),
        out_shape=jax.ShapeDtypeStruct((B_pad, Co * HW), x_nchw.dtype),
        grid_spec=pltpu.PrefetchScalarGridSpec(
            num_scalar_prefetch=0,
            grid=(n_blocks,),
            in_specs=[
                pl.BlockSpec((block_rows, C * HW), lambda b: (b, 0)),
                pl.BlockSpec((9, HW), lambda b: (0, 0)),                # masks
                pl.BlockSpec(memory_space=pltpu.MemorySpace.SMEM),      # w1
                pl.BlockSpec(memory_space=pltpu.MemorySpace.SMEM),      # b1
                pl.BlockSpec(memory_space=pltpu.MemorySpace.SMEM),      # w2
                pl.BlockSpec(memory_space=pltpu.MemorySpace.SMEM),      # b2
                pl.BlockSpec(memory_space=pltpu.MemorySpace.SMEM),      # conv w
                pl.BlockSpec(memory_space=pltpu.MemorySpace.SMEM),      # conv b
            ],
            out_specs=pl.BlockSpec((block_rows, Co * HW), lambda b: (b, 0)),
        ),
        compiler_params=pltpu.CompilerParams(
            dimension_semantics=("parallel",)),
    )(x_flat, masks,
      w1.reshape(-1), b1.reshape(-1), w2.reshape(-1), b2.reshape(-1),
      wc.reshape(-1), bc.reshape(-1))

    return out_flat[:B].reshape(B, Co, H, W)  # free reshape back to NCHW


def init_params(key, in_channels, out_channels, reduction=1):
    c_mid = in_channels // reduction
    k1, k2, k3, k4, k5, k6 = jax.random.split(key, 6)
    # Linear weights stored as (in, out) so the math is y @ W + b.
    w1 = jax.random.normal(k1, (in_channels, c_mid), jnp.float32) * 0.1
    b1 = jax.random.normal(k2, (1, c_mid), jnp.float32) * 0.1
    w2 = jax.random.normal(k3, (c_mid, in_channels), jnp.float32) * 0.1
    b2 = jax.random.normal(k4, (1, in_channels), jnp.float32) * 0.1
    # Conv weight stored HWIO (3, 3, C_in, C_out); cross-correlation like nn.Conv2d.
    wc = jax.random.normal(k5, (3, 3, in_channels, out_channels), jnp.float32) * 0.1
    bc = jax.random.normal(k6, (1, out_channels), jnp.float32) * 0.1
    return dict(w1=w1, b1=b1, w2=w2, b2=b2, wc=wc, bc=bc)


def se_layer_reference(x_nchw, params):
    """Pure-JAX reference mirroring the PyTorch forward (for verification)."""
    w1, b1, w2, b2, wc, bc = (params["w1"], params["b1"], params["w2"],
                              params["b2"], params["wc"], params["bc"])
    y = jnp.mean(x_nchw, axis=(2, 3))                         # (B, C)
    y = jnp.maximum(y @ w1 + b1, 0.0)
    y = jax.nn.sigmoid(y @ w2 + b2)                           # (B, C)
    out = x_nchw * y[:, :, None, None]
    out = jax.lax.conv_general_dilated(
        out, wc, window_strides=(1, 1), padding="SAME",
        dimension_numbers=("NCHW", "HWIO", "NCHW"))
    return out + bc[0][None, :, None, None]


if __name__ == "__main__":
    key = jax.random.PRNGKey(0)
    kx, kp, kx2 = jax.random.split(key, 3)

    B, C, H, W = 2, 4, 16, 16
    Co = 4
    params = init_params(kp, in_channels=C, out_channels=Co, reduction=1)

    x = jax.random.normal(kx, (B, C, H, W), jnp.float32)
    out = jax.block_until_ready(jax.jit(se_layer_forward)(x, params))
    ref = se_layer_reference(x, params)
    assert out.shape == (B, Co, H, W), out.shape
    assert jnp.allclose(out, ref, atol=1e-4, rtol=1e-4), float(
        jnp.max(jnp.abs(out - ref)))

    # Second case exercises batch padding + a multi-step ("parallel") grid.
    x2 = jax.random.normal(kx2, (10, C, H, W), jnp.float32)
    out2 = jax.block_until_ready(jax.jit(se_layer_forward)(x2, params))
    ref2 = se_layer_reference(x2, params)
    assert jnp.allclose(out2, ref2, atol=1e-4, rtol=1e-4), float(
        jnp.max(jnp.abs(out2 - ref2)))

    print("KERNEL_OK")
</pallas_src>

<mosaic_0001>
module attributes {stable_mosaic.version = 11 : i64} {
  func.func @_se_conv_kernel(%arg0: i32, %arg1: memref<8x1024xf32, #tpu.memory_space<vmem>>, %arg2: memref<9x256xf32, #tpu.memory_space<vmem>>, %arg3: memref<16xf32, #tpu.memory_space<smem>>, %arg4: memref<4xf32, #tpu.memory_space<smem>>, %arg5: memref<16xf32, #tpu.memory_space<smem>>, %arg6: memref<4xf32, #tpu.memory_space<smem>>, %arg7: memref<144xf32, #tpu.memory_space<smem>>, %arg8: memref<4xf32, #tpu.memory_space<smem>>, %arg9: memref<8x1024xf32, #tpu.memory_space<vmem>>) attributes {dimension_semantics = [#tpu.dimension_semantics<parallel>], iteration_bounds = array<i64: 1>, scalar_prefetch = 0 : i64, scratch_operands = 0 : i64, tpu.core_type = #tpu.core_type<tc>, window_params = [{transform_indices = @transform_0, window_bounds = array<i64: 8, 1024>}, {pipeline_mode = #tpu.pipeline_mode<synchronous>, transform_indices = @transform_1, window_bounds = array<i64: 9, 256>}, {transform_indices = @transform_2, window_bounds = array<i64: 16>}, {transform_indices = @transform_3, window_bounds = array<i64: 4>}, {transform_indices = @transform_4, window_bounds = array<i64: 16>}, {transform_indices = @transform_5, window_bounds = array<i64: 4>}, {transform_indices = @transform_6, window_bounds = array<i64: 144>}, {transform_indices = @transform_7, window_bounds = array<i64: 4>}, {transform_indices = @transform_8, window_bounds = array<i64: 8, 1024>}]} {
    %c0 = arith.constant 0 : index
    %c0_0 = arith.constant 0 : index
    %0 = vector.load %arg2[%c0, %c0_0] : memref<9x256xf32, #tpu.memory_space<vmem>>, vector<1x256xf32>
    %c1 = arith.constant 1 : index
    %c0_1 = arith.constant 0 : index
    %1 = vector.load %arg2[%c1, %c0_1] : memref<9x256xf32, #tpu.memory_space<vmem>>, vector<1x256xf32>
    %c2 = arith.constant 2 : index
    %c0_2 = arith.constant 0 : index
    %2 = vector.load %arg2[%c2, %c0_2] : memref<9x256xf32, #tpu.memory_space<vmem>>, vector<1x256xf32>
    %c3 = arith.constant 3 : index
    %c0_3 = arith.constant 0 : index
    %3 = vector.load %arg2[%c3, %c0_3] : memref<9x256xf32, #tpu.memory_space<vmem>>, vector<1x256xf32>
    %c5 = arith.constant 5 : index
    %c0_4 = arith.constant 0 : index
    %4 = vector.load %arg2[%c5, %c0_4] : memref<9x256xf32, #tpu.memory_space<vmem>>, vector<1x256xf32>
    %c6 = arith.constant 6 : index
    %c0_5 = arith.constant 0 : index
    %5 = vector.load %arg2[%c6, %c0_5] : memref<9x256xf32, #tpu.memory_space<vmem>>, vector<1x256xf32>
    %c7 = arith.constant 7 : index
    %c0_6 = arith.constant 0 : index
    %6 = vector.load %arg2[%c7, %c0_6] : memref<9x256xf32, #tpu.memory_space<vmem>>, vector<1x256xf32>
    %c8 = arith.constant 8 : index
    %c0_7 = arith.constant 0 : index
    %7 = vector.load %arg2[%c8, %c0_7] : memref<9x256xf32, #tpu.memory_space<vmem>>, vector<1x256xf32>
    %c0_i32 = arith.constant 0 : i32
    %c8_i32 = arith.constant 8 : i32
    %8 = arith.muli %c0_i32, %c8_i32 : i32
    %9 = tpu.assume_multiple %8, 8 : i32
    %10 = arith.index_cast %9 : i32 to index
    %c0_8 = arith.constant 0 : index
    %11 = vector.load %arg1[%10, %c0_8] : memref<8x1024xf32, #tpu.memory_space<vmem>>, vector<8x256xf32>
    %12 = arith.index_cast %9 : i32 to index
    %c256 = arith.constant 256 : index
    %13 = vector.load %arg1[%12, %c256] : memref<8x1024xf32, #tpu.memory_space<vmem>>, vector<8x256xf32>
    %14 = arith.index_cast %9 : i32 to index
    %c512 = arith.constant 512 : index
    %15 = vector.load %arg1[%14, %c512] : memref<8x1024xf32, #tpu.memory_space<vmem>>, vector<8x256xf32>
    %16 = arith.index_cast %9 : i32 to index
    %c768 = arith.constant 768 : index
    %17 = vector.load %arg1[%16, %c768] : memref<8x1024xf32, #tpu.memory_space<vmem>>, vector<8x256xf32>
    %cst = arith.constant dense<0.000000e+00> : vector<8xf32>
    %18 = vector.multi_reduction <add>, %11, %cst [1] : vector<8x256xf32> to vector<8xf32>
    %19 = vector.shape_cast %18 : vector<8xf32> to vector<8x1xf32>
    %cst_9 = arith.constant 3.906250e-03 : f32
    %20 = vector.broadcast %cst_9 : f32 to vector<8x1xf32>
    %21 = arith.mulf %19, %20 : vector<8x1xf32>
    %cst_10 = arith.constant dense<0.000000e+00> : vector<8xf32>
    %22 = vector.multi_reduction <add>, %13, %cst_10 [1] : vector<8x256xf32> to vector<8xf32>
    %23 = vector.shape_cast %22 : vector<8xf32> to vector<8x1xf32>
    %cst_11 = arith.constant 3.906250e-03 : f32
    %24 = vector.broadcast %cst_11 : f32 to vector<8x1xf32>
    %25 = arith.mulf %23, %24 : vector<8x1xf32>
    %cst_12 = arith.constant dense<0.000000e+00> : vector<8xf32>
    %26 = vector.multi_reduction <add>, %15, %cst_12 [1] : vector<8x256xf32> to vector<8xf32>
    %27 = vector.shape_cast %26 : vector<8xf32> to vector<8x1xf32>
    %cst_13 = arith.constant 3.906250e-03 : f32
    %28 = vector.broadcast %cst_13 : f32 to vector<8x1xf32>
    %29 = arith.mulf %27, %28 : vector<8x1xf32>
    %cst_14 = arith.constant dense<0.000000e+00> : vector<8xf32>
    %30 = vector.multi_reduction <add>, %17, %cst_14 [1] : vector<8x256xf32> to vector<8xf32>
    %31 = vector.shape_cast %30 : vector<8xf32> to vector<8x1xf32>
    %cst_15 = arith.constant 3.906250e-03 : f32
    %32 = vector.broadcast %cst_15 : f32 to vector<8x1xf32>
    %33 = arith.mulf %31, %32 : vector<8x1xf32>
    %c0_16 = arith.constant 0 : index
    %34 = memref.load %arg3[%c0_16] : memref<16xf32, #tpu.memory_space<smem>>
    %35 = vector.broadcast %34 : f32 to vector<8x1xf32>
    %36 = arith.mulf %21, %35 : vector<8x1xf32>
    %c4 = arith.constant 4 : index
    %37 = memref.load %arg3[%c4] : memref<16xf32, #tpu.memory_space<smem>>
    %38 = vector.broadcast %37 : f32 to vector<8x1xf32>
    %39 = arith.mulf %25, %38 : vector<8x1xf32>
    %40 = arith.addf %36, %39 : vector<8x1xf32>
    %c8_17 = arith.constant 8 : index
    %41 = memref.load %arg3[%c8_17] : memref<16xf32, #tpu.memory_space<smem>>
    %42 = vector.broadcast %41 : f32 to vector<8x1xf32>
    %43 = arith.mulf %29, %42 : vector<8x1xf32>
    %44 = arith.addf %40, %43 : vector<8x1xf32>
    %c12 = arith.constant 12 : index
    %45 = memref.load %arg3[%c12] : memref<16xf32, #tpu.memory_space<smem>>
    %46 = vector.broadcast %45 : f32 to vector<8x1xf32>
    %47 = arith.mulf %33, %46 : vector<8x1xf32>
    %48 = arith.addf %44, %47 : vector<8x1xf32>
    %c0_18 = arith.constant 0 : index
    %49 = memref.load %arg4[%c0_18] : memref<4xf32, #tpu.memory_space<smem>>
    %50 = vector.broadcast %49 : f32 to vector<8x1xf32>
    %51 = arith.addf %48, %50 : vector<8x1xf32>
    %cst_19 = arith.constant 0.000000e+00 : f32
    %52 = vector.broadcast %cst_19 : f32 to vector<8x1xf32>
    %53 = arith.maximumf %51, %52 : vector<8x1xf32>
    %c1_20 = arith.constant 1 : index
    %54 = memref.load %arg3[%c1_20] : memref<16xf32, #tpu.memory_space<smem>>
    %55 = vector.broadcast %54 : f32 to vector<8x1xf32>
    %56 = arith.mulf %21, %55 : vector<8x1xf32>
    %c5_21 = arith.constant 5 : index
    %57 = memref.load %arg3[%c5_21] : memref<16xf32, #tpu.memory_space<smem>>
    %58 = vector.broadcast %57 : f32 to vector<8x1xf32>
    %59 = arith.mulf %25, %58 : vector<8x1xf32>
    %60 = arith.addf %56, %59 : vector<8x1xf32>
    %c9 = arith.constant 9 : index
    %61 = memref.load %arg3[%c9] : memref<16xf32, #tpu.memory_space<smem>>
    %62 = vector.broadcast %61 : f32 to vector<8x1xf32>
    %63 = arith.mulf %29, %62 : vector<8x1xf32>
    %64 = arith.addf %60, %63 : vector<8x1xf32>
    %c13 = arith.constant 13 : index
    %65 = memref.load %arg3[%c13] : memref<16xf32, #tpu.memory_space<smem>>
    %66 = vector.broadcast %65 : f32 to vector<8x1xf32>
    %67 = arith.mulf %33, %66 : vector<8x1xf32>
    %68 = arith.addf %64, %67 : vector<8x1xf32>
    %c1_22 = arith.constant 1 : index
    %69 = memref.load %arg4[%c1_22] : memref<4xf32, #tpu.memory_space<smem>>
    %70 = vector.broadcast %69 : f32 to vector<8x1xf32>
    %71 = arith.addf %68, %70 : vector<8x1xf32>
    %cst_23 = arith.constant 0.000000e+00 : f32
    %72 = vector.broadcast %cst_23 : f32 to vector<8x1xf32>
    %73 = arith.maximumf %71, %72 : vector<8x1xf32>
    %c2_24 = arith.constant 2 : index
    %74 = memref.load %arg3[%c2_24] : memref<16xf32, #tpu.memory_space<smem>>
    %75 = vector.broadcast %74 : f32 to vector<8x1xf32>
    %76 = arith.mulf %21, %75 : vector<8x1xf32>
    %c6_25 = arith.constant 6 : index
    %77 = memref.load %arg3[%c6_25] : memref<16xf32, #tpu.memory_space<smem>>
    %78 = vector.broadcast %77 : f32 to vector<8x1xf32>
    %79 = arith.mulf %25, %78 : vector<8x1xf32>
    %80 = arith.addf %76, %79 : vector<8x1xf32>
    %c10 = arith.constant 10 : index
    %81 = memref.load %arg3[%c10] : memref<16xf32, #tpu.memory_space<smem>>
    %82 = vector.broadcast %81 : f32 to vector<8x1xf32>
    %83 = arith.mulf %29, %82 : vector<8x1xf32>
    %84 = arith.addf %80, %83 : vector<8x1xf32>
    %c14 = arith.constant 14 : index
    %85 = memref.load %arg3[%c14] : memref<16xf32, #tpu.memory_space<smem>>
    %86 = vector.broadcast %85 : f32 to vector<8x1xf32>
    %87 = arith.mulf %33, %86 : vector<8x1xf32>
    %88 = arith.addf %84, %87 : vector<8x1xf32>
    %c2_26 = arith.constant 2 : index
    %89 = memref.load %arg4[%c2_26] : memref<4xf32, #tpu.memory_space<smem>>
    %90 = vector.broadcast %89 : f32 to vector<8x1xf32>
    %91 = arith.addf %88, %90 : vector<8x1xf32>
    %cst_27 = arith.constant 0.000000e+00 : f32
    %92 = vector.broadcast %cst_27 : f32 to vector<8x1xf32>
    %93 = arith.maximumf %91, %92 : vector<8x1xf32>
    %c3_28 = arith.constant 3 : index
    %94 = memref.load %arg3[%c3_28] : memref<16xf32, #tpu.memory_space<smem>>
    %95 = vector.broadcast %94 : f32 to vector<8x1xf32>
    %96 = arith.mulf %21, %95 : vector<8x1xf32>
    %c7_29 = arith.constant 7 : index
    %97 = memref.load %arg3[%c7_29] : memref<16xf32, #tpu.memory_space<smem>>
    %98 = vector.broadcast %97 : f32 to vector<8x1xf32>
    %99 = arith.mulf %25, %98 : vector<8x1xf32>
    %100 = arith.addf %96, %99 : vector<8x1xf32>
    %c11 = arith.constant 11 : index
    %101 = memref.load %arg3[%c11] : memref<16xf32, #tpu.memory_space<smem>>
    %102 = vector.broadcast %101 : f32 to vector<8x1xf32>
    %103 = arith.mulf %29, %102 : vector<8x1xf32>
    %104 = arith.addf %100, %103 : vector<8x1xf32>
    %c15 = arith.constant 15 : index
    %105 = memref.load %arg3[%c15] : memref<16xf32, #tpu.memory_space<smem>>
    %106 = vector.broadcast %105 : f32 to vector<8x1xf32>
    %107 = arith.mulf %33, %106 : vector<8x1xf32>
    %108 = arith.addf %104, %107 : vector<8x1xf32>
    %c3_30 = arith.constant 3 : index
    %109 = memref.load %arg4[%c3_30] : memref<4xf32, #tpu.memory_space<smem>>
    %110 = vector.broadcast %109 : f32 to vector<8x1xf32>
    %111 = arith.addf %108, %110 : vector<8x1xf32>
    %cst_31 = arith.constant 0.000000e+00 : f32
    %112 = vector.broadcast %cst_31 : f32 to vector<8x1xf32>
    %113 = arith.maximumf %111, %112 : vector<8x1xf32>
    %c0_32 = arith.constant 0 : index
    %114 = memref.load %arg5[%c0_32] : memref<16xf32, #tpu.memory_space<smem>>
    %115 = vector.broadcast %114 : f32 to vector<8x1xf32>
    %116 = arith.mulf %53, %115 : vector<8x1xf32>
    %c4_33 = arith.constant 4 : index
    %117 = memref.load %arg5[%c4_33] : memref<16xf32, #tpu.memory_space<smem>>
    %118 = vector.broadcast %117 : f32 to vector<8x1xf32>
    %119 = arith.mulf %73, %118 : vector<8x1xf32>
    %120 = arith.addf %116, %119 : vector<8x1xf32>
    %c8_34 = arith.constant 8 : index
    %121 = memref.load %arg5[%c8_34] : memref<16xf32, #tpu.memory_space<smem>>
    %122 = vector.broadcast %121 : f32 to vector<8x1xf32>
    %123 = arith.mulf %93, %122 : vector<8x1xf32>
    %124 = arith.addf %120, %123 : vector<8x1xf32>
    %c12_35 = arith.constant 12 : index
    %125 = memref.load %arg5[%c12_35] : memref<16xf32, #tpu.memory_space<smem>>
    %126 = vector.broadcast %125 : f32 to vector<8x1xf32>
    %127 = arith.mulf %113, %126 : vector<8x1xf32>
    %128 = arith.addf %124, %127 : vector<8x1xf32>
    %c0_36 = arith.constant 0 : index
    %129 = memref.load %arg6[%c0_36] : memref<4xf32, #tpu.memory_space<smem>>
    %130 = vector.broadcast %129 : f32 to vector<8x1xf32>
    %131 = arith.addf %128, %130 : vector<8x1xf32>
    %132 = arith.negf %131 : vector<8x1xf32>
    %133 = math.exp %132 : vector<8x1xf32>
    %cst_37 = arith.constant 1.000000e+00 : f32
    %134 = vector.broadcast %cst_37 : f32 to vector<8x1xf32>
    %135 = arith.addf %134, %133 : vector<8x1xf32>
    %136 = arith.divf %134, %135 : vector<8x1xf32>
    %c1_38 = arith.constant 1 : index
    %137 = memref.load %arg5[%c1_38] : memref<16xf32, #tpu.memory_space<smem>>
    %138 = vector.broadcast %137 : f32 to vector<8x1xf32>
    %139 = arith.mulf %53, %138 : vector<8x1xf32>
    %c5_39 = arith.constant 5 : index
    %140 = memref.load %arg5[%c5_39] : memref<16xf32, #tpu.memory_space<smem>>
    %141 = vector.broadcast %140 : f32 to vector<8x1xf32>
    %142 = arith.mulf %73, %141 : vector<8x1xf32>
    %143 = arith.addf %139, %142 : vector<8x1xf32>
    %c9_40 = arith.constant 9 : index
    %144 = memref.load %arg5[%c9_40] : memref<16xf32, #tpu.memory_space<smem>>
    %145 = vector.broadcast %144 : f32 to vector<8x1xf32>
    %146 = arith.mulf %93, %145 : vector<8x1xf32>
    %147 = arith.addf %143, %146 : vector<8x1xf32>
    %c13_41 = arith.constant 13 : index
    %148 = memref.load %arg5[%c13_41] : memref<16xf32, #tpu.memory_space<smem>>
    %149 = vector.broadcast %148 : f32 to vector<8x1xf32>
    %150 = arith.mulf %113, %149 : vector<8x1xf32>
    %151 = arith.addf %147, %150 : vector<8x1xf32>
    %c1_42 = arith.constant 1 : index
    %152 = memref.load %arg6[%c1_42] : memref<4xf32, #tpu.memory_space<smem>>
    %153 = vector.broadcast %152 : f32 to vector<8x1xf32>
    %154 = arith.addf %151, %153 : vector<8x1xf32>
    %155 = arith.negf %154 : vector<8x1xf32>
    %156 = math.exp %155 : vector<8x1xf32>
    %cst_43 = arith.constant 1.000000e+00 : f32
    %157 = vector.broadcast %cst_43 : f32 to vector<8x1xf32>
    %158 = arith.addf %157, %156 : vector<8x1xf32>
    %159 = arith.divf %157, %158 : vector<8x1xf32>
    %c2_44 = arith.constant 2 : index
    %160 = memref.load %arg5[%c2_44] : memref<16xf32, #tpu.memory_space<smem>>
    %161 = vector.broadcast %160 : f32 to vector<8x1xf32>
    %162 = arith.mulf %53, %161 : vector<8x1xf32>
    %c6_45 = arith.constant 6 : index
    %163 = memref.load %arg5[%c6_45] : memref<16xf32, #tpu.memory_space<smem>>
    %164 = vector.broadcast %163 : f32 to vector<8x1xf32>
    %165 = arith.mulf %73, %164 : vector<8x1xf32>
    %166 = arith.addf %162, %165 : vector<8x1xf32>
    %c10_46 = arith.constant 10 : index
    %167 = memref.load %arg5[%c10_46] : memref<16xf32, #tpu.memory_space<smem>>
    %168 = vector.broadcast %167 : f32 to vector<8x1xf32>
    %169 = arith.mulf %93, %168 : vector<8x1xf32>
    %170 = arith.addf %166, %169 : vector<8x1xf32>
    %c14_47 = arith.constant 14 : index
    %171 = memref.load %arg5[%c14_47] : memref<16xf32, #tpu.memory_space<smem>>
    %172 = vector.broadcast %171 : f32 to vector<8x1xf32>
    %173 = arith.mulf %113, %172 : vector<8x1xf32>
    %174 = arith.addf %170, %173 : vector<8x1xf32>
    %c2_48 = arith.constant 2 : index
    %175 = memref.load %arg6[%c2_48] : memref<4xf32, #tpu.memory_space<smem>>
    %176 = vector.broadcast %175 : f32 to vector<8x1xf32>
    %177 = arith.addf %174, %176 : vector<8x1xf32>
    %178 = arith.negf %177 : vector<8x1xf32>
    %179 = math.exp %178 : vector<8x1xf32>
    %cst_49 = arith.constant 1.000000e+00 : f32
    %180 = vector.broadcast %cst_49 : f32 to vector<8x1xf32>
    %181 = arith.addf %180, %179 : vector<8x1xf32>
    %182 = arith.divf %180, %181 : vector<8x1xf32>
    %c3_50 = arith.constant 3 : index
    %183 = memref.load %arg5[%c3_50] : memref<16xf32, #tpu.memory_space<smem>>
    %184 = vector.broadcast %183 : f32 to vector<8x1xf32>
    %185 = arith.mulf %53, %184 : vector<8x1xf32>
    %c7_51 = arith.constant 7 : index
    %186 = memref.load %arg5[%c7_51] : memref<16xf32, #tpu.memory_space<smem>>
    %187 = vector.broadcast %186 : f32 to vector<8x1xf32>
    %188 = arith.mulf %73, %187 : vector<8x1xf32>
    %189 = arith.addf %185, %188 : vector<8x1xf32>
    %c11_52 = arith.constant 11 : index
    %190 = memref.load %arg5[%c11_52] : memref<16xf32, #tpu.memory_space<smem>>
    %191 = vector.broadcast %190 : f32 to vector<8x1xf32>
    %192 = arith.mulf %93, %191 : vector<8x1xf32>
    %193 = arith.addf %189, %192 : vector<8x1xf32>
    %c15_53 = arith.constant 15 : index
    %194 = memref.load %arg5[%c15_53] : memref<16xf32, #tpu.memory_space<smem>>
    %195 = vector.broadcast %194 : f32 to vector<8x1xf32>
    %196 = arith.mulf %113, %195 : vector<8x1xf32>
    %197 = arith.addf %193, %196 : vector<8x1xf32>
    %c3_54 = arith.constant 3 : index
    %198 = memref.load %arg6[%c3_54] : memref<4xf32, #tpu.memory_space<smem>>
    %199 = vector.broadcast %198 : f32 to vector<8x1xf32>
    %200 = arith.addf %197, %199 : vector<8x1xf32>
    %201 = arith.negf %200 : vector<8x1xf32>
    %202 = math.exp %201 : vector<8x1xf32>
    %cst_55 = arith.constant 1.000000e+00 : f32
    %203 = vector.broadcast %cst_55 : f32 to vector<8x1xf32>
    %204 = arith.addf %203, %202 : vector<8x1xf32>
    %205 = arith.divf %203, %204 : vector<8x1xf32>
    %c0_56 = arith.constant 0 : index
    %206 = memref.load %arg8[%c0_56] : memref<4xf32, #tpu.memory_space<smem>>
    %207 = vector.broadcast %206 : f32 to vector<8x256xf32>
    %c1_57 = arith.constant 1 : index
    %208 = memref.load %arg8[%c1_57] : memref<4xf32, #tpu.memory_space<smem>>
    %209 = vector.broadcast %208 : f32 to vector<8x256xf32>
    %c2_58 = arith.constant 2 : index
    %210 = memref.load %arg8[%c2_58] : memref<4xf32, #tpu.memory_space<smem>>
    %211 = vector.broadcast %210 : f32 to vector<8x256xf32>
    %c3_59 = arith.constant 3 : index
    %212 = memref.load %arg8[%c3_59] : memref<4xf32, #tpu.memory_space<smem>>
    %213 = vector.broadcast %212 : f32 to vector<8x256xf32>
    %c17_i32 = arith.constant 17 : i32
    %214 = tpu.dynamic_rotate %11 by %c17_i32 dim 1 : vector<8x256xf32>, i32 -> vector<8x256xf32>
    %215 = vector.broadcast %0 : vector<1x256xf32> to vector<8x256xf32>
    %216 = arith.mulf %214, %215 : vector<8x256xf32>
    %c0_60 = arith.constant 0 : index
    %217 = memref.load %arg7[%c0_60] : memref<144xf32, #tpu.memory_space<smem>>
    %218 = vector.broadcast %217 : f32 to vector<8x256xf32>
    %219 = arith.mulf %218, %216 : vector<8x256xf32>
    %c1_61 = arith.constant 1 : index
    %220 = memref.load %arg7[%c1_61] : memref<144xf32, #tpu.memory_space<smem>>
    %221 = vector.broadcast %220 : f32 to vector<8x256xf32>
    %222 = arith.mulf %221, %216 : vector<8x256xf32>
    %c2_62 = arith.constant 2 : index
    %223 = memref.load %arg7[%c2_62] : memref<144xf32, #tpu.memory_space<smem>>
    %224 = vector.broadcast %223 : f32 to vector<8x256xf32>
    %225 = arith.mulf %224, %216 : vector<8x256xf32>
    %c3_63 = arith.constant 3 : index
    %226 = memref.load %arg7[%c3_63] : memref<144xf32, #tpu.memory_space<smem>>
    %227 = vector.broadcast %226 : f32 to vector<8x256xf32>
    %228 = arith.mulf %227, %216 : vector<8x256xf32>
    %c16_i32 = arith.constant 16 : i32
    %229 = tpu.dynamic_rotate %11 by %c16_i32 dim 1 : vector<8x256xf32>, i32 -> vector<8x256xf32>
    %230 = vector.broadcast %1 : vector<1x256xf32> to vector<8x256xf32>
    %231 = arith.mulf %229, %230 : vector<8x256xf32>
    %c16 = arith.constant 16 : index
    %232 = memref.load %arg7[%c16] : memref<144xf32, #tpu.memory_space<smem>>
    %233 = vector.broadcast %232 : f32 to vector<8x256xf32>
    %234 = arith.mulf %233, %231 : vector<8x256xf32>
    %235 = arith.addf %219, %234 : vector<8x256xf32>
    %c17 = arith.constant 17 : index
    %236 = memref.load %arg7[%c17] : memref<144xf32, #tpu.memory_space<smem>>
    %237 = vector.broadcast %236 : f32 to vector<8x256xf32>
    %238 = arith.mulf %237, %231 : vector<8x256xf32>
    %239 = arith.addf %222, %238 : vector<8x256xf32>
    %c18 = arith.constant 18 : index
    %240 = memref.load %arg7[%c18] : memref<144xf32, #tpu.memory_space<smem>>
    %241 = vector.broadcast %240 : f32 to vector<8x256xf32>
    %242 = arith.mulf %241, %231 : vector<8x256xf32>
    %243 = arith.addf %225, %242 : vector<8x256xf32>
    %c19 = arith.constant 19 : index
    %244 = memref.load %arg7[%c19] : memref<144xf32, #tpu.memory_space<smem>>
    %245 = vector.broadcast %244 : f32 to vector<8x256xf32>
    %246 = arith.mulf %245, %231 : vector<8x256xf32>
    %247 = arith.addf %228, %246 : vector<8x256xf32>
    %c15_i32 = arith.constant 15 : i32
    %248 = tpu.dynamic_rotate %11 by %c15_i32 dim 1 : vector<8x256xf32>, i32 -> vector<8x256xf32>
    %249 = vector.broadcast %2 : vector<1x256xf32> to vector<8x256xf32>
    %250 = arith.mulf %248, %249 : vector<8x256xf32>
    %c32 = arith.constant 32 : index
    %251 = memref.load %arg7[%c32] : memref<144xf32, #tpu.memory_space<smem>>
    %252 = vector.broadcast %251 : f32 to vector<8x256xf32>
    %253 = arith.mulf %252, %250 : vector<8x256xf32>
    %254 = arith.addf %235, %253 : vector<8x256xf32>
    %c33 = arith.constant 33 : index
    %255 = memref.load %arg7[%c33] : memref<144xf32, #tpu.memory_space<smem>>
    %256 = vector.broadcast %255 : f32 to vector<8x256xf32>
    %257 = arith.mulf %256, %250 : vector<8x256xf32>
    %258 = arith.addf %239, %257 : vector<8x256xf32>
    %c34 = arith.constant 34 : index
    %259 = memref.load %arg7[%c34] : memref<144xf32, #tpu.memory_space<smem>>
    %260 = vector.broadcast %259 : f32 to vector<8x256xf32>
    %261 = arith.mulf %260, %250 : vector<8x256xf32>
    %262 = arith.addf %243, %261 : vector<8x256xf32>
    %c35 = arith.constant 35 : index
    %263 = memref.load %arg7[%c35] : memref<144xf32, #tpu.memory_space<smem>>
    %264 = vector.broadcast %263 : f32 to vector<8x256xf32>
    %265 = arith.mulf %264, %250 : vector<8x256xf32>
    %266 = arith.addf %247, %265 : vector<8x256xf32>
    %c1_i32 = arith.constant 1 : i32
    %267 = tpu.dynamic_rotate %11 by %c1_i32 dim 1 : vector<8x256xf32>, i32 -> vector<8x256xf32>
    %268 = vector.broadcast %3 : vector<1x256xf32> to vector<8x256xf32>
    %269 = arith.mulf %267, %268 : vector<8x256xf32>
    %c48 = arith.constant 48 : index
    %270 = memref.load %arg7[%c48] : memref<144xf32, #tpu.memory_space<smem>>
    %271 = vector.broadcast %270 : f32 to vector<8x256xf32>
    %272 = arith.mulf %271, %269 : vector<8x256xf32>
    %273 = arith.addf %254, %272 : vector<8x256xf32>
    %c49 = arith.constant 49 : index
    %274 = memref.load %arg7[%c49] : memref<144xf32, #tpu.memory_space<smem>>
    %275 = vector.broadcast %274 : f32 to vector<8x256xf32>
    %276 = arith.mulf %275, %269 : vector<8x256xf32>
    %277 = arith.addf %258, %276 : vector<8x256xf32>
    %c50 = arith.constant 50 : index
    %278 = memref.load %arg7[%c50] : memref<144xf32, #tpu.memory_space<smem>>
    %279 = vector.broadcast %278 : f32 to vector<8x256xf32>
    %280 = arith.mulf %279, %269 : vector<8x256xf32>
    %281 = arith.addf %262, %280 : vector<8x256xf32>
    %c51 = arith.constant 51 : index
    %282 = memref.load %arg7[%c51] : memref<144xf32, #tpu.memory_space<smem>>
    %283 = vector.broadcast %282 : f32 to vector<8x256xf32>
    %284 = arith.mulf %283, %269 : vector<8x256xf32>
    %285 = arith.addf %266, %284 : vector<8x256xf32>
    %c64 = arith.constant 64 : index
    %286 = memref.load %arg7[%c64] : memref<144xf32, #tpu.memory_space<smem>>
    %287 = vector.broadcast %286 : f32 to vector<8x256xf32>
    %288 = arith.mulf %287, %11 : vector<8x256xf32>
    %289 = arith.addf %273, %288 : vector<8x256xf32>
    %c65 = arith.constant 65 : index
    %290 = memref.load %arg7[%c65] : memref<144xf32, #tpu.memory_space<smem>>
    %291 = vector.broadcast %290 : f32 to vector<8x256xf32>
    %292 = arith.mulf %291, %11 : vector<8x256xf32>
    %293 = arith.addf %277, %292 : vector<8x256xf32>
    %c66 = arith.constant 66 : index
    %294 = memref.load %arg7[%c66] : memref<144xf32, #tpu.memory_space<smem>>
    %295 = vector.broadcast %294 : f32 to vector<8x256xf32>
    %296 = arith.mulf %295, %11 : vector<8x256xf32>
    %297 = arith.addf %281, %296 : vector<8x256xf32>
    %c67 = arith.constant 67 : index
    %298 = memref.load %arg7[%c67] : memref<144xf32, #tpu.memory_space<smem>>
    %299 = vector.broadcast %298 : f32 to vector<8x256xf32>
    %300 = arith.mulf %299, %11 : vector<8x256xf32>
    %301 = arith.addf %285, %300 : vector<8x256xf32>
    %c255_i32 = arith.constant 255 : i32
    %302 = tpu.dynamic_rotate %11 by %c255_i32 dim 1 : vector<8x256xf32>, i32 -> vector<8x256xf32>
    %303 = vector.broadcast %4 : vector<1x256xf32> to vector<8x256xf32>
    %304 = arith.mulf %302, %303 : vector<8x256xf32>
    %c80 = arith.constant 80 : index
    %305 = memref.load %arg7[%c80] : memref<144xf32, #tpu.memory_space<smem>>
    %306 = vector.broadcast %305 : f32 to vector<8x256xf32>
    %307 = arith.mulf %306, %304 : vector<8x256xf32>
    %308 = arith.addf %289, %307 : vector<8x256xf32>
    %c81 = arith.constant 81 : index
    %309 = memref.load %arg7[%c81] : memref<144xf32, #tpu.memory_space<smem>>
    %310 = vector.broadcast %309 : f32 to vector<8x256xf32>
    %311 = arith.mulf %310, %304 : vector<8x256xf32>
    %312 = arith.addf %293, %311 : vector<8x256xf32>
    %c82 = arith.constant 82 : index
    %313 = memref.load %arg7[%c82] : memref<144xf32, #tpu.memory_space<smem>>
    %314 = vector.broadcast %313 : f32 to vector<8x256xf32>
    %315 = arith.mulf %314, %304 : vector<8x256xf32>
    %316 = arith.addf %297, %315 : vector<8x256xf32>
    %c83 = arith.constant 83 : index
    %317 = memref.load %arg7[%c83] : memref<144xf32, #tpu.memory_space<smem>>
    %318 = vector.broadcast %317 : f32 to vector<8x256xf32>
    %319 = arith.mulf %318, %304 : vector<8x256xf32>
    %320 = arith.addf %301, %319 : vector<8x256xf32>
    %c241_i32 = arith.constant 241 : i32
    %321 = tpu.dynamic_rotate %11 by %c241_i32 dim 1 : vector<8x256xf32>, i32 -> vector<8x256xf32>
    %322 = vector.broadcast %5 : vector<1x256xf32> to vector<8x256xf32>
    %323 = arith.mulf %321, %322 : vector<8x256xf32>
    %c96 = arith.constant 96 : index
    %324 = memref.load %arg7[%c96] : memref<144xf32, #tpu.memory_space<smem>>
    %325 = vector.broadcast %324 : f32 to vector<8x256xf32>
    %326 = arith.mulf %325, %323 : vector<8x256xf32>
    %327 = arith.addf %308, %326 : vector<8x256xf32>
    %c97 = arith.constant 97 : index
    %328 = memref.load %arg7[%c97] : memref<144xf32, #tpu.memory_space<smem>>
    %329 = vector.broadcast %328 : f32 to vector<8x256xf32>
    %330 = arith.mulf %329, %323 : vector<8x256xf32>
    %331 = arith.addf %312, %330 : vector<8x256xf32>
    %c98 = arith.constant 98 : index
    %332 = memref.load %arg7[%c98] : memref<144xf32, #tpu.memory_space<smem>>
    %333 = vector.broadcast %332 : f32 to vector<8x256xf32>
    %334 = arith.mulf %333, %323 : vector<8x256xf32>
    %335 = arith.addf %316, %334 : vector<8x256xf32>
    %c99 = arith.constant 99 : index
    %336 = memref.load %arg7[%c99] : memref<144xf32, #tpu.memory_space<smem>>
    %337 = vector.broadcast %336 : f32 to vector<8x256xf32>
    %338 = arith.mulf %337, %323 : vector<8x256xf32>
    %339 = arith.addf %320, %338 : vector<8x256xf32>
    %c240_i32 = arith.constant 240 : i32
    %340 = tpu.dynamic_rotate %11 by %c240_i32 dim 1 : vector<8x256xf32>, i32 -> vector<8x256xf32>
    %341 = vector.broadcast %6 : vector<1x256xf32> to vector<8x256xf32>
    %342 = arith.mulf %340, %341 : vector<8x256xf32>
    %c112 = arith.constant 112 : index
    %343 = memref.load %arg7[%c112] : memref<144xf32, #tpu.memory_space<smem>>
    %344 = vector.broadcast %343 : f32 to vector<8x256xf32>
    %345 = arith.mulf %344, %342 : vector<8x256xf32>
    %346 = arith.addf %327, %345 : vector<8x256xf32>
    %c113 = arith.constant 113 : index
    %347 = memref.load %arg7[%c113] : memref<144xf32, #tpu.memory_space<smem>>
    %348 = vector.broadcast %347 : f32 to vector<8x256xf32>
    %349 = arith.mulf %348, %342 : vector<8x256xf32>
    %350 = arith.addf %331, %349 : vector<8x256xf32>
    %c114 = arith.constant 114 : index
    %351 = memref.load %arg7[%c114] : memref<144xf32, #tpu.memory_space<smem>>
    %352 = vector.broadcast %351 : f32 to vector<8x256xf32>
    %353 = arith.mulf %352, %342 : vector<8x256xf32>
    %354 = arith.addf %335, %353 : vector<8x256xf32>
    %c115 = arith.constant 115 : index
    %355 = memref.load %arg7[%c115] : memref<144xf32, #tpu.memory_space<smem>>
    %356 = vector.broadcast %355 : f32 to vector<8x256xf32>
    %357 = arith.mulf %356, %342 : vector<8x256xf32>
    %358 = arith.addf %339, %357 : vector<8x256xf32>
    %c239_i32 = arith.constant 239 : i32
    %359 = tpu.dynamic_rotate %11 by %c239_i32 dim 1 : vector<8x256xf32>, i32 -> vector<8x256xf32>
    %360 = vector.broadcast %7 : vector<1x256xf32> to vector<8x256xf32>
    %361 = arith.mulf %359, %360 : vector<8x256xf32>
    %c128 = arith.constant 128 : index
    %362 = memref.load %arg7[%c128] : memref<144xf32, #tpu.memory_space<smem>>
    %363 = vector.broadcast %362 : f32 to vector<8x256xf32>
    %364 = arith.mulf %363, %361 : vector<8x256xf32>
    %365 = arith.addf %346, %364 : vector<8x256xf32>
    %c129 = arith.constant 129 : index
    %366 = memref.load %arg7[%c129] : memref<144xf32, #tpu.memory_space<smem>>
    %367 = vector.broadcast %366 : f32 to vector<8x256xf32>
    %368 = arith.mulf %367, %361 : vector<8x256xf32>
    %369 = arith.addf %350, %368 : vector<8x256xf32>
    %c130 = arith.constant 130 : index
    %370 = memref.load %arg7[%c130] : memref<144xf32, #tpu.memory_space<smem>>
    %371 = vector.broadcast %370 : f32 to vector<8x256xf32>
    %372 = arith.mulf %371, %361 : vector<8x256xf32>
    %373 = arith.addf %354, %372 : vector<8x256xf32>
    %c131 = arith.constant 131 : index
    %374 = memref.load %arg7[%c131] : memref<144xf32, #tpu.memory_space<smem>>
    %375 = vector.broadcast %374 : f32 to vector<8x256xf32>
    %376 = arith.mulf %375, %361 : vector<8x256xf32>
    %377 = arith.addf %358, %376 : vector<8x256xf32>
    %378 = vector.broadcast %136 : vector<8x1xf32> to vector<8x256xf32>
    %379 = arith.mulf %378, %365 : vector<8x256xf32>
    %380 = arith.addf %207, %379 : vector<8x256xf32>
    %381 = vector.broadcast %136 : vector<8x1xf32> to vector<8x256xf32>
    %382 = arith.mulf %381, %369 : vector<8x256xf32>
    %383 = arith.addf %209, %382 : vector<8x256xf32>
    %384 = vector.broadcast %136 : vector<8x1xf32> to vector<8x256xf32>
    %385 = arith.mulf %384, %373 : vector<8x256xf32>
    %386 = arith.addf %211, %385 : vector<8x256xf32>
    %387 = vector.broadcast %136 : vector<8x1xf32> to vector<8x256xf32>
    %388 = arith.mulf %387, %377 : vector<8x256xf32>
    %389 = arith.addf %213, %388 : vector<8x256xf32>
    %c17_i32_64 = arith.constant 17 : i32
    %390 = tpu.dynamic_rotate %13 by %c17_i32_64 dim 1 : vector<8x256xf32>, i32 -> vector<8x256xf32>
    %391 = vector.broadcast %0 : vector<1x256xf32> to vector<8x256xf32>
    %392 = arith.mulf %390, %391 : vector<8x256xf32>
    %c4_65 = arith.constant 4 : index
    %393 = memref.load %arg7[%c4_65] : memref<144xf32, #tpu.memory_space<smem>>
    %394 = vector.broadcast %393 : f32 to vector<8x256xf32>
    %395 = arith.mulf %394, %392 : vector<8x256xf32>
    %c5_66 = arith.constant 5 : index
    %396 = memref.load %arg7[%c5_66] : memref<144xf32, #tpu.memory_space<smem>>
    %397 = vector.broadcast %396 : f32 to vector<8x256xf32>
    %398 = arith.mulf %397, %392 : vector<8x256xf32>
    %c6_67 = arith.constant 6 : index
    %399 = memref.load %arg7[%c6_67] : memref<144xf32, #tpu.memory_space<smem>>
    %400 = vector.broadcast %399 : f32 to vector<8x256xf32>
    %401 = arith.mulf %400, %392 : vector<8x256xf32>
    %c7_68 = arith.constant 7 : index
    %402 = memref.load %arg7[%c7_68] : memref<144xf32, #tpu.memory_space<smem>>
    %403 = vector.broadcast %402 : f32 to vector<8x256xf32>
    %404 = arith.mulf %403, %392 : vector<8x256xf32>
    %c16_i32_69 = arith.constant 16 : i32
    %405 = tpu.dynamic_rotate %13 by %c16_i32_69 dim 1 : vector<8x256xf32>, i32 -> vector<8x256xf32>
    %406 = vector.broadcast %1 : vector<1x256xf32> to vector<8x256xf32>
    %407 = arith.mulf %405, %406 : vector<8x256xf32>
    %c20 = arith.constant 20 : index
    %408 = memref.load %arg7[%c20] : memref<144xf32, #tpu.memory_space<smem>>
    %409 = vector.broadcast %408 : f32 to vector<8x256xf32>
    %410 = arith.mulf %409, %407 : vector<8x256xf32>
    %411 = arith.addf %395, %410 : vector<8x256xf32>
    %c21 = arith.constant 21 : index
    %412 = memref.load %arg7[%c21] : memref<144xf32, #tpu.memory_space<smem>>
    %413 = vector.broadcast %412 : f32 to vector<8x256xf32>
    %414 = arith.mulf %413, %407 : vector<8x256xf32>
    %415 = arith.addf %398, %414 : vector<8x256xf32>
    %c22 = arith.constant 22 : index
    %416 = memref.load %arg7[%c22] : memref<144xf32, #tpu.memory_space<smem>>
    %417 = vector.broadcast %416 : f32 to vector<8x256xf32>
    %418 = arith.mulf %417, %407 : vector<8x256xf32>
    %419 = arith.addf %401, %418 : vector<8x256xf32>
    %c23 = arith.constant 23 : index
    %420 = memref.load %arg7[%c23] : memref<144xf32, #tpu.memory_space<smem>>
    %421 = vector.broadcast %420 : f32 to vector<8x256xf32>
    %422 = arith.mulf %421, %407 : vector<8x256xf32>
    %423 = arith.addf %404, %422 : vector<8x256xf32>
    %c15_i32_70 = arith.constant 15 : i32
    %424 = tpu.dynamic_rotate %13 by %c15_i32_70 dim 1 : vector<8x256xf32>, i32 -> vector<8x256xf32>
    %425 = vector.broadcast %2 : vector<1x256xf32> to vector<8x256xf32>
    %426 = arith.mulf %424, %425 : vector<8x256xf32>
    %c36 = arith.constant 36 : index
    %427 = memref.load %arg7[%c36] : memref<144xf32, #tpu.memory_space<smem>>
    %428 = vector.broadcast %427 : f32 to vector<8x256xf32>
    %429 = arith.mulf %428, %426 : vector<8x256xf32>
    %430 = arith.addf %411, %429 : vector<8x256xf32>
    %c37 = arith.constant 37 : index
    %431 = memref.load %arg7[%c37] : memref<144xf32, #tpu.memory_space<smem>>
    %432 = vector.broadcast %431 : f32 to vector<8x256xf32>
    %433 = arith.mulf %432, %426 : vector<8x256xf32>
    %434 = arith.addf %415, %433 : vector<8x256xf32>
    %c38 = arith.constant 38 : index
    %435 = memref.load %arg7[%c38] : memref<144xf32, #tpu.memory_space<smem>>
    %436 = vector.broadcast %435 : f32 to vector<8x256xf32>
    %437 = arith.mulf %436, %426 : vector<8x256xf32>
    %438 = arith.addf %419, %437 : vector<8x256xf32>
    %c39 = arith.constant 39 : index
    %439 = memref.load %arg7[%c39] : memref<144xf32, #tpu.memory_space<smem>>
    %440 = vector.broadcast %439 : f32 to vector<8x256xf32>
    %441 = arith.mulf %440, %426 : vector<8x256xf32>
    %442 = arith.addf %423, %441 : vector<8x256xf32>
    %c1_i32_71 = arith.constant 1 : i32
    %443 = tpu.dynamic_rotate %13 by %c1_i32_71 dim 1 : vector<8x256xf32>, i32 -> vector<8x256xf32>
    %444 = vector.broadcast %3 : vector<1x256xf32> to vector<8x256xf32>
    %445 = arith.mulf %443, %444 : vector<8x256xf32>
    %c52 = arith.constant 52 : index
    %446 = memref.load %arg7[%c52] : memref<144xf32, #tpu.memory_space<smem>>
    %447 = vector.broadcast %446 : f32 to vector<8x256xf32>
    %448 = arith.mulf %447, %445 : vector<8x256xf32>
    %449 = arith.addf %430, %448 : vector<8x256xf32>
    %c53 = arith.constant 53 : index
    %450 = memref.load %arg7[%c53] : memref<144xf32, #tpu.memory_space<smem>>
    %451 = vector.broadcast %450 : f32 to vector<8x256xf32>
    %452 = arith.mulf %451, %445 : vector<8x256xf32>
    %453 = arith.addf %434, %452 : vector<8x256xf32>
    %c54 = arith.constant 54 : index
    %454 = memref.load %arg7[%c54] : memref<144xf32, #tpu.memory_space<smem>>
    %455 = vector.broadcast %454 : f32 to vector<8x256xf32>
    %456 = arith.mulf %455, %445 : vector<8x256xf32>
    %457 = arith.addf %438, %456 : vector<8x256xf32>
    %c55 = arith.constant 55 : index
    %458 = memref.load %arg7[%c55] : memref<144xf32, #tpu.memory_space<smem>>
    %459 = vector.broadcast %458 : f32 to vector<8x256xf32>
    %460 = arith.mulf %459, %445 : vector<8x256xf32>
    %461 = arith.addf %442, %460 : vector<8x256xf32>
    %c68 = arith.constant 68 : index
    %462 = memref.load %arg7[%c68] : memref<144xf32, #tpu.memory_space<smem>>
    %463 = vector.broadcast %462 : f32 to vector<8x256xf32>
    %464 = arith.mulf %463, %13 : vector<8x256xf32>
    %465 = arith.addf %449, %464 : vector<8x256xf32>
    %c69 = arith.constant 69 : index
    %466 = memref.load %arg7[%c69] : memref<144xf32, #tpu.memory_space<smem>>
    %467 = vector.broadcast %466 : f32 to vector<8x256xf32>
    %468 = arith.mulf %467, %13 : vector<8x256xf32>
    %469 = arith.addf %453, %468 : vector<8x256xf32>
    %c70 = arith.constant 70 : index
    %470 = memref.load %arg7[%c70] : memref<144xf32, #tpu.memory_space<smem>>
    %471 = vector.broadcast %470 : f32 to vector<8x256xf32>
    %472 = arith.mulf %471, %13 : vector<8x256xf32>
    %473 = arith.addf %457, %472 : vector<8x256xf32>
    %c71 = arith.constant 71 : index
    %474 = memref.load %arg7[%c71] : memref<144xf32, #tpu.memory_space<smem>>
    %475 = vector.broadcast %474 : f32 to vector<8x256xf32>
    %476 = arith.mulf %475, %13 : vector<8x256xf32>
    %477 = arith.addf %461, %476 : vector<8x256xf32>
    %c255_i32_72 = arith.constant 255 : i32
    %478 = tpu.dynamic_rotate %13 by %c255_i32_72 dim 1 : vector<8x256xf32>, i32 -> vector<8x256xf32>
    %479 = vector.broadcast %4 : vector<1x256xf32> to vector<8x256xf32>
    %480 = arith.mulf %478, %479 : vector<8x256xf32>
    %c84 = arith.constant 84 : index
    %481 = memref.load %arg7[%c84] : memref<144xf32, #tpu.memory_space<smem>>
    %482 = vector.broadcast %481 : f32 to vector<8x256xf32>
    %483 = arith.mulf %482, %480 : vector<8x256xf32>
    %484 = arith.addf %465, %483 : vector<8x256xf32>
    %c85 = arith.constant 85 : index
    %485 = memref.load %arg7[%c85] : memref<144xf32, #tpu.memory_space<smem>>
    %486 = vector.broadcast %485 : f32 to vector<8x256xf32>
    %487 = arith.mulf %486, %480 : vector<8x256xf32>
    %488 = arith.addf %469, %487 : vector<8x256xf32>
    %c86 = arith.constant 86 : index
    %489 = memref.load %arg7[%c86] : memref<144xf32, #tpu.memory_space<smem>>
    %490 = vector.broadcast %489 : f32 to vector<8x256xf32>
    %491 = arith.mulf %490, %480 : vector<8x256xf32>
    %492 = arith.addf %473, %491 : vector<8x256xf32>
    %c87 = arith.constant 87 : index
    %493 = memref.load %arg7[%c87] : memref<144xf32, #tpu.memory_space<smem>>
    %494 = vector.broadcast %493 : f32 to vector<8x256xf32>
    %495 = arith.mulf %494, %480 : vector<8x256xf32>
    %496 = arith.addf %477, %495 : vector<8x256xf32>
    %c241_i32_73 = arith.constant 241 : i32
    %497 = tpu.dynamic_rotate %13 by %c241_i32_73 dim 1 : vector<8x256xf32>, i32 -> vector<8x256xf32>
    %498 = vector.broadcast %5 : vector<1x256xf32> to vector<8x256xf32>
    %499 = arith.mulf %497, %498 : vector<8x256xf32>
    %c100 = arith.constant 100 : index
    %500 = memref.load %arg7[%c100] : memref<144xf32, #tpu.memory_space<smem>>
    %501 = vector.broadcast %500 : f32 to vector<8x256xf32>
    %502 = arith.mulf %501, %499 : vector<8x256xf32>
    %503 = arith.addf %484, %502 : vector<8x256xf32>
    %c101 = arith.constant 101 : index
    %504 = memref.load %arg7[%c101] : memref<144xf32, #tpu.memory_space<smem>>
    %505 = vector.broadcast %504 : f32 to vector<8x256xf32>
    %506 = arith.mulf %505, %499 : vector<8x256xf32>
    %507 = arith.addf %488, %506 : vector<8x256xf32>
    %c102 = arith.constant 102 : index
    %508 = memref.load %arg7[%c102] : memref<144xf32, #tpu.memory_space<smem>>
    %509 = vector.broadcast %508 : f32 to vector<8x256xf32>
    %510 = arith.mulf %509, %499 : vector<8x256xf32>
    %511 = arith.addf %492, %510 : vector<8x256xf32>
    %c103 = arith.constant 103 : index
    %512 = memref.load %arg7[%c103] : memref<144xf32, #tpu.memory_space<smem>>
    %513 = vector.broadcast %512 : f32 to vector<8x256xf32>
    %514 = arith.mulf %513, %499 : vector<8x256xf32>
    %515 = arith.addf %496, %514 : vector<8x256xf32>
    %c240_i32_74 = arith.constant 240 : i32
    %516 = tpu.dynamic_rotate %13 by %c240_i32_74 dim 1 : vector<8x256xf32>, i32 -> vector<8x256xf32>
    %517 = vector.broadcast %6 : vector<1x256xf32> to vector<8x256xf32>
    %518 = arith.mulf %516, %517 : vector<8x256xf32>
    %c116 = arith.constant 116 : index
    %519 = memref.load %arg7[%c116] : memref<144xf32, #tpu.memory_space<smem>>
    %520 = vector.broadcast %519 : f32 to vector<8x256xf32>
    %521 = arith.mulf %520, %518 : vector<8x256xf32>
    %522 = arith.addf %503, %521 : vector<8x256xf32>
    %c117 = arith.constant 117 : index
    %523 = memref.load %arg7[%c117] : memref<144xf32, #tpu.memory_space<smem>>
    %524 = vector.broadcast %523 : f32 to vector<8x256xf32>
    %525 = arith.mulf %524, %518 : vector<8x256xf32>
    %526 = arith.addf %507, %525 : vector<8x256xf32>
    %c118 = arith.constant 118 : index
    %527 = memref.load %arg7[%c118] : memref<144xf32, #tpu.memory_space<smem>>
    %528 = vector.broadcast %527 : f32 to vector<8x256xf32>
    %529 = arith.mulf %528, %518 : vector<8x256xf32>
    %530 = arith.addf %511, %529 : vector<8x256xf32>
    %c119 = arith.constant 119 : index
    %531 = memref.load %arg7[%c119] : memref<144xf32, #tpu.memory_space<smem>>
    %532 = vector.broadcast %531 : f32 to vector<8x256xf32>
    %533 = arith.mulf %532, %518 : vector<8x256xf32>
    %534 = arith.addf %515, %533 : vector<8x256xf32>
    %c239_i32_75 = arith.constant 239 : i32
    %535 = tpu.dynamic_rotate %13 by %c239_i32_75 dim 1 : vector<8x256xf32>, i32 -> vector<8x256xf32>
    %536 = vector.broadcast %7 : vector<1x256xf32> to vector<8x256xf32>
    %537 = arith.mulf %535, %536 : vector<8x256xf32>
    %c132 = arith.constant 132 : index
    %538 = memref.load %arg7[%c132] : memref<144xf32, #tpu.memory_space<smem>>
    %539 = vector.broadcast %538 : f32 to vector<8x256xf32>
    %540 = arith.mulf %539, %537 : vector<8x256xf32>
    %541 = arith.addf %522, %540 : vector<8x256xf32>
    %c133 = arith.constant 133 : index
    %542 = memref.load %arg7[%c133] : memref<144xf32, #tpu.memory_space<smem>>
    %543 = vector.broadcast %542 : f32 to vector<8x256xf32>
    %544 = arith.mulf %543, %537 : vector<8x256xf32>
    %545 = arith.addf %526, %544 : vector<8x256xf32>
    %c134 = arith.constant 134 : index
    %546 = memref.load %arg7[%c134] : memref<144xf32, #tpu.memory_space<smem>>
    %547 = vector.broadcast %546 : f32 to vector<8x256xf32>
    %548 = arith.mulf %547, %537 : vector<8x256xf32>
    %549 = arith.addf %530, %548 : vector<8x256xf32>
    %c135 = arith.constant 135 : index
    %550 = memref.load %arg7[%c135] : memref<144xf32, #tpu.memory_space<smem>>
    %551 = vector.broadcast %550 : f32 to vector<8x256xf32>
    %552 = arith.mulf %551, %537 : vector<8x256xf32>
    %553 = arith.addf %534, %552 : vector<8x256xf32>
    %554 = vector.broadcast %159 : vector<8x1xf32> to vector<8x256xf32>
    %555 = arith.mulf %554, %541 : vector<8x256xf32>
    %556 = arith.addf %380, %555 : vector<8x256xf32>
    %557 = vector.broadcast %159 : vector<8x1xf32> to vector<8x256xf32>
    %558 = arith.mulf %557, %545 : vector<8x256xf32>
    %559 = arith.addf %383, %558 : vector<8x256xf32>
    %560 = vector.broadcast %159 : vector<8x1xf32> to vector<8x256xf32>
    %561 = arith.mulf %560, %549 : vector<8x256xf32>
    %562 = arith.addf %386, %561 : vector<8x256xf32>
    %563 = vector.broadcast %159 : vector<8x1xf32> to vector<8x256xf32>
    %564 = arith.mulf %563, %553 : vector<8x256xf32>
    %565 = arith.addf %389, %564 : vector<8x256xf32>
    %c17_i32_76 = arith.constant 17 : i32
    %566 = tpu.dynamic_rotate %15 by %c17_i32_76 dim 1 : vector<8x256xf32>, i32 -> vector<8x256xf32>
    %567 = vector.broadcast %0 : vector<1x256xf32> to vector<8x256xf32>
    %568 = arith.mulf %566, %567 : vector<8x256xf32>
    %c8_77 = arith.constant 8 : index
    %569 = memref.load %arg7[%c8_77] : memref<144xf32, #tpu.memory_space<smem>>
    %570 = vector.broadcast %569 : f32 to vector<8x256xf32>
    %571 = arith.mulf %570, %568 : vector<8x256xf32>
    %c9_78 = arith.constant 9 : index
    %572 = memref.load %arg7[%c9_78] : memref<144xf32, #tpu.memory_space<smem>>
    %573 = vector.broadcast %572 : f32 to vector<8x256xf32>
    %574 = arith.mulf %573, %568 : vector<8x256xf32>
    %c10_79 = arith.constant 10 : index
    %575 = memref.load %arg7[%c10_79] : memref<144xf32, #tpu.memory_space<smem>>
    %576 = vector.broadcast %575 : f32 to vector<8x256xf32>
    %577 = arith.mulf %576, %568 : vector<8x256xf32>
    %c11_80 = arith.constant 11 : index
    %578 = memref.load %arg7[%c11_80] : memref<144xf32, #tpu.memory_space<smem>>
    %579 = vector.broadcast %578 : f32 to vector<8x256xf32>
    %580 = arith.mulf %579, %568 : vector<8x256xf32>
    %c16_i32_81 = arith.constant 16 : i32
    %581 = tpu.dynamic_rotate %15 by %c16_i32_81 dim 1 : vector<8x256xf32>, i32 -> vector<8x256xf32>
    %582 = vector.broadcast %1 : vector<1x256xf32> to vector<8x256xf32>
    %583 = arith.mulf %581, %582 : vector<8x256xf32>
    %c24 = arith.constant 24 : index
    %584 = memref.load %arg7[%c24] : memref<144xf32, #tpu.memory_space<smem>>
    %585 = vector.broadcast %584 : f32 to vector<8x256xf32>
    %586 = arith.mulf %585, %583 : vector<8x256xf32>
    %587 = arith.addf %571, %586 : vector<8x256xf32>
    %c25 = arith.constant 25 : index
    %588 = memref.load %arg7[%c25] : memref<144xf32, #tpu.memory_space<smem>>
    %589 = vector.broadcast %588 : f32 to vector<8x256xf32>
    %590 = arith.mulf %589, %583 : vector<8x256xf32>
    %591 = arith.addf %574, %590 : vector<8x256xf32>
    %c26 = arith.constant 26 : index
    %592 = memref.load %arg7[%c26] : memref<144xf32, #tpu.memory_space<smem>>
    %593 = vector.broadcast %592 : f32 to vector<8x256xf32>
    %594 = arith.mulf %593, %583 : vector<8x256xf32>
    %595 = arith.addf %577, %594 : vector<8x256xf32>
    %c27 = arith.constant 27 : index
    %596 = memref.load %arg7[%c27] : memref<144xf32, #tpu.memory_space<smem>>
    %597 = vector.broadcast %596 : f32 to vector<8x256xf32>
    %598 = arith.mulf %597, %583 : vector<8x256xf32>
    %599 = arith.addf %580, %598 : vector<8x256xf32>
    %c15_i32_82 = arith.constant 15 : i32
    %600 = tpu.dynamic_rotate %15 by %c15_i32_82 dim 1 : vector<8x256xf32>, i32 -> vector<8x256xf32>
    %601 = vector.broadcast %2 : vector<1x256xf32> to vector<8x256xf32>
    %602 = arith.mulf %600, %601 : vector<8x256xf32>
    %c40 = arith.constant 40 : index
    %603 = memref.load %arg7[%c40] : memref<144xf32, #tpu.memory_space<smem>>
    %604 = vector.broadcast %603 : f32 to vector<8x256xf32>
    %605 = arith.mulf %604, %602 : vector<8x256xf32>
    %606 = arith.addf %587, %605 : vector<8x256xf32>
    %c41 = arith.constant 41 : index
    %607 = memref.load %arg7[%c41] : memref<144xf32, #tpu.memory_space<smem>>
    %608 = vector.broadcast %607 : f32 to vector<8x256xf32>
    %609 = arith.mulf %608, %602 : vector<8x256xf32>
    %610 = arith.addf %591, %609 : vector<8x256xf32>
    %c42 = arith.constant 42 : index
    %611 = memref.load %arg7[%c42] : memref<144xf32, #tpu.memory_space<smem>>
    %612 = vector.broadcast %611 : f32 to vector<8x256xf32>
    %613 = arith.mulf %612, %602 : vector<8x256xf32>
    %614 = arith.addf %595, %613 : vector<8x256xf32>
    %c43 = arith.constant 43 : index
    %615 = memref.load %arg7[%c43] : memref<144xf32, #tpu.memory_space<smem>>
    %616 = vector.broadcast %615 : f32 to vector<8x256xf32>
    %617 = arith.mulf %616, %602 : vector<8x256xf32>
    %618 = arith.addf %599, %617 : vector<8x256xf32>
    %c1_i32_83 = arith.constant 1 : i32
    %619 = tpu.dynamic_rotate %15 by %c1_i32_83 dim 1 : vector<8x256xf32>, i32 -> vector<8x256xf32>
    %620 = vector.broadcast %3 : vector<1x256xf32> to vector<8x256xf32>
    %621 = arith.mulf %619, %620 : vector<8x256xf32>
    %c56 = arith.constant 56 : index
    %622 = memref.load %arg7[%c56] : memref<144xf32, #tpu.memory_space<smem>>
    %623 = vector.broadcast %622 : f32 to vector<8x256xf32>
    %624 = arith.mulf %623, %621 : vector<8x256xf32>
    %625 = arith.addf %606, %624 : vector<8x256xf32>
    %c57 = arith.constant 57 : index
    %626 = memref.load %arg7[%c57] : memref<144xf32, #tpu.memory_space<smem>>
    %627 = vector.broadcast %626 : f32 to vector<8x256xf32>
    %628 = arith.mulf %627, %621 : vector<8x256xf32>
    %629 = arith.addf %610, %628 : vector<8x256xf32>
    %c58 = arith.constant 58 : index
    %630 = memref.load %arg7[%c58] : memref<144xf32, #tpu.memory_space<smem>>
    %631 = vector.broadcast %630 : f32 to vector<8x256xf32>
    %632 = arith.mulf %631, %621 : vector<8x256xf32>
    %633 = arith.addf %614, %632 : vector<8x256xf32>
    %c59 = arith.constant 59 : index
    %634 = memref.load %arg7[%c59] : memref<144xf32, #tpu.memory_space<smem>>
    %635 = vector.broadcast %634 : f32 to vector<8x256xf32>
    %636 = arith.mulf %635, %621 : vector<8x256xf32>
    %637 = arith.addf %618, %636 : vector<8x256xf32>
    %c72 = arith.constant 72 : index
    %638 = memref.load %arg7[%c72] : memref<144xf32, #tpu.memory_space<smem>>
    %639 = vector.broadcast %638 : f32 to vector<8x256xf32>
    %640 = arith.mulf %639, %15 : vector<8x256xf32>
    %641 = arith.addf %625, %640 : vector<8x256xf32>
    %c73 = arith.constant 73 : index
    %642 = memref.load %arg7[%c73] : memref<144xf32, #tpu.memory_space<smem>>
    %643 = vector.broadcast %642 : f32 to vector<8x256xf32>
    %644 = arith.mulf %643, %15 : vector<8x256xf32>
    %645 = arith.addf %629, %644 : vector<8x256xf32>
    %c74 = arith.constant 74 : index
    %646 = memref.load %arg7[%c74] : memref<144xf32, #tpu.memory_space<smem>>
    %647 = vector.broadcast %646 : f32 to vector<8x256xf32>
    %648 = arith.mulf %647, %15 : vector<8x256xf32>
    %649 = arith.addf %633, %648 : vector<8x256xf32>
    %c75 = arith.constant 75 : index
    %650 = memref.load %arg7[%c75] : memref<144xf32, #tpu.memory_space<smem>>
    %651 = vector.broadcast %650 : f32 to vector<8x256xf32>
    %652 = arith.mulf %651, %15 : vector<8x256xf32>
    %653 = arith.addf %637, %652 : vector<8x256xf32>
    %c255_i32_84 = arith.constant 255 : i32
    %654 = tpu.dynamic_rotate %15 by %c255_i32_84 dim 1 : vector<8x256xf32>, i32 -> vector<8x256xf32>
    %655 = vector.broadcast %4 : vector<1x256xf32> to vector<8x256xf32>
    %656 = arith.mulf %654, %655 : vector<8x256xf32>
    %c88 = arith.constant 88 : index
    %657 = memref.load %arg7[%c88] : memref<144xf32, #tpu.memory_space<smem>>
    %658 = vector.broadcast %657 : f32 to vector<8x256xf32>
    %659 = arith.mulf %658, %656 : vector<8x256xf32>
    %660 = arith.addf %641, %659 : vector<8x256xf32>
    %c89 = arith.constant 89 : index
    %661 = memref.load %arg7[%c89] : memref<144xf32, #tpu.memory_space<smem>>
    %662 = vector.broadcast %661 : f32 to vector<8x256xf32>
    %663 = arith.mulf %662, %656 : vector<8x256xf32>
    %664 = arith.addf %645, %663 : vector<8x256xf32>
    %c90 = arith.constant 90 : index
    %665 = memref.load %arg7[%c90] : memref<144xf32, #tpu.memory_space<smem>>
    %666 = vector.broadcast %665 : f32 to vector<8x256xf32>
    %667 = arith.mulf %666, %656 : vector<8x256xf32>
    %668 = arith.addf %649, %667 : vector<8x256xf32>
    %c91 = arith.constant 91 : index
    %669 = memref.load %arg7[%c91] : memref<144xf32, #tpu.memory_space<smem>>
    %670 = vector.broadcast %669 : f32 to vector<8x256xf32>
    %671 = arith.mulf %670, %656 : vector<8x256xf32>
    %672 = arith.addf %653, %671 : vector<8x256xf32>
    %c241_i32_85 = arith.constant 241 : i32
    %673 = tpu.dynamic_rotate %15 by %c241_i32_85 dim 1 : vector<8x256xf32>, i32 -> vector<8x256xf32>
    %674 = vector.broadcast %5 : vector<1x256xf32> to vector<8x256xf32>
    %675 = arith.mulf %673, %674 : vector<8x256xf32>
    %c104 = arith.constant 104 : index
    %676 = memref.load %arg7[%c104] : memref<144xf32, #tpu.memory_space<smem>>
    %677 = vector.broadcast %676 : f32 to vector<8x256xf32>
    %678 = arith.mulf %677, %675 : vector<8x256xf32>
    %679 = arith.addf %660, %678 : vector<8x256xf32>
    %c105 = arith.constant 105 : index
    %680 = memref.load %arg7[%c105] : memref<144xf32, #tpu.memory_space<smem>>
    %681 = vector.broadcast %680 : f32 to vector<8x256xf32>
    %682 = arith.mulf %681, %675 : vector<8x256xf32>
    %683 = arith.addf %664, %682 : vector<8x256xf32>
    %c106 = arith.constant 106 : index
    %684 = memref.load %arg7[%c106] : memref<144xf32, #tpu.memory_space<smem>>
    %685 = vector.broadcast %684 : f32 to vector<8x256xf32>
    %686 = arith.mulf %685, %675 : vector<8x256xf32>
    %687 = arith.addf %668, %686 : vector<8x256xf32>
    %c107 = arith.constant 107 : index
    %688 = memref.load %arg7[%c107] : memref<144xf32, #tpu.memory_space<smem>>
    %689 = vector.broadcast %688 : f32 to vector<8x256xf32>
    %690 = arith.mulf %689, %675 : vector<8x256xf32>
    %691 = arith.addf %672, %690 : vector<8x256xf32>
    %c240_i32_86 = arith.constant 240 : i32
    %692 = tpu.dynamic_rotate %15 by %c240_i32_86 dim 1 : vector<8x256xf32>, i32 -> vector<8x256xf32>
    %693 = vector.broadcast %6 : vector<1x256xf32> to vector<8x256xf32>
    %694 = arith.mulf %692, %693 : vector<8x256xf32>
    %c120 = arith.constant 120 : index
    %695 = memref.load %arg7[%c120] : memref<144xf32, #tpu.memory_space<smem>>
    %696 = vector.broadcast %695 : f32 to vector<8x256xf32>
    %697 = arith.mulf %696, %694 : vector<8x256xf32>
    %698 = arith.addf %679, %697 : vector<8x256xf32>
    %c121 = arith.constant 121 : index
    %699 = memref.load %arg7[%c121] : memref<144xf32, #tpu.memory_space<smem>>
    %700 = vector.broadcast %699 : f32 to vector<8x256xf32>
    %701 = arith.mulf %700, %694 : vector<8x256xf32>
    %702 = arith.addf %683, %701 : vector<8x256xf32>
    %c122 = arith.constant 122 : index
    %703 = memref.load %arg7[%c122] : memref<144xf32, #tpu.memory_space<smem>>
    %704 = vector.broadcast %703 : f32 to vector<8x256xf32>
    %705 = arith.mulf %704, %694 : vector<8x256xf32>
    %706 = arith.addf %687, %705 : vector<8x256xf32>
    %c123 = arith.constant 123 : index
    %707 = memref.load %arg7[%c123] : memref<144xf32, #tpu.memory_space<smem>>
    %708 = vector.broadcast %707 : f32 to vector<8x256xf32>
    %709 = arith.mulf %708, %694 : vector<8x256xf32>
    %710 = arith.addf %691, %709 : vector<8x256xf32>
    %c239_i32_87 = arith.constant 239 : i32
    %711 = tpu.dynamic_rotate %15 by %c239_i32_87 dim 1 : vector<8x256xf32>, i32 -> vector<8x256xf32>
    %712 = vector.broadcast %7 : vector<1x256xf32> to vector<8x256xf32>
    %713 = arith.mulf %711, %712 : vector<8x256xf32>
    %c136 = arith.constant 136 : index
    %714 = memref.load %arg7[%c136] : memref<144xf32, #tpu.memory_space<smem>>
    %715 = vector.broadcast %714 : f32 to vector<8x256xf32>
    %716 = arith.mulf %715, %713 : vector<8x256xf32>
    %717 = arith.addf %698, %716 : vector<8x256xf32>
    %c137 = arith.constant 137 : index
    %718 = memref.load %arg7[%c137] : memref<144xf32, #tpu.memory_space<smem>>
    %719 = vector.broadcast %718 : f32 to vector<8x256xf32>
    %720 = arith.mulf %719, %713 : vector<8x256xf32>
    %721 = arith.addf %702, %720 : vector<8x256xf32>
    %c138 = arith.constant 138 : index
    %722 = memref.load %arg7[%c138] : memref<144xf32, #tpu.memory_space<smem>>
    %723 = vector.broadcast %722 : f32 to vector<8x256xf32>
    %724 = arith.mulf %723, %713 : vector<8x256xf32>
    %725 = arith.addf %706, %724 : vector<8x256xf32>
    %c139 = arith.constant 139 : index
    %726 = memref.load %arg7[%c139] : memref<144xf32, #tpu.memory_space<smem>>
    %727 = vector.broadcast %726 : f32 to vector<8x256xf32>
    %728 = arith.mulf %727, %713 : vector<8x256xf32>
    %729 = arith.addf %710, %728 : vector<8x256xf32>
    %730 = vector.broadcast %182 : vector<8x1xf32> to vector<8x256xf32>
    %731 = arith.mulf %730, %717 : vector<8x256xf32>
    %732 = arith.addf %556, %731 : vector<8x256xf32>
    %733 = vector.broadcast %182 : vector<8x1xf32> to vector<8x256xf32>
    %734 = arith.mulf %733, %721 : vector<8x256xf32>
    %735 = arith.addf %559, %734 : vector<8x256xf32>
    %736 = vector.broadcast %182 : vector<8x1xf32> to vector<8x256xf32>
    %737 = arith.mulf %736, %725 : vector<8x256xf32>
    %738 = arith.addf %562, %737 : vector<8x256xf32>
    %739 = vector.broadcast %182 : vector<8x1xf32> to vector<8x256xf32>
    %740 = arith.mulf %739, %729 : vector<8x256xf32>
    %741 = arith.addf %565, %740 : vector<8x256xf32>
    %c17_i32_88 = arith.constant 17 : i32
    %742 = tpu.dynamic_rotate %17 by %c17_i32_88 dim 1 : vector<8x256xf32>, i32 -> vector<8x256xf32>
    %743 = vector.broadcast %0 : vector<1x256xf32> to vector<8x256xf32>
    %744 = arith.mulf %742, %743 : vector<8x256xf32>
    %c12_89 = arith.constant 12 : index
    %745 = memref.load %arg7[%c12_89] : memref<144xf32, #tpu.memory_space<smem>>
    %746 = vector.broadcast %745 : f32 to vector<8x256xf32>
    %747 = arith.mulf %746, %744 : vector<8x256xf32>
    %c13_90 = arith.constant 13 : index
    %748 = memref.load %arg7[%c13_90] : memref<144xf32, #tpu.memory_space<smem>>
    %749 = vector.broadcast %748 : f32 to vector<8x256xf32>
    %750 = arith.mulf %749, %744 : vector<8x256xf32>
    %c14_91 = arith.constant 14 : index
    %751 = memref.load %arg7[%c14_91] : memref<144xf32, #tpu.memory_space<smem>>
    %752 = vector.broadcast %751 : f32 to vector<8x256xf32>
    %753 = arith.mulf %752, %744 : vector<8x256xf32>
    %c15_92 = arith.constant 15 : index
    %754 = memref.load %arg7[%c15_92] : memref<144xf32, #tpu.memory_space<smem>>
    %755 = vector.broadcast %754 : f32 to vector<8x256xf32>
    %756 = arith.mulf %755, %744 : vector<8x256xf32>
    %c16_i32_93 = arith.constant 16 : i32
    %757 = tpu.dynamic_rotate %17 by %c16_i32_93 dim 1 : vector<8x256xf32>, i32 -> vector<8x256xf32>
    %758 = vector.broadcast %1 : vector<1x256xf32> to vector<8x256xf32>
    %759 = arith.mulf %757, %758 : vector<8x256xf32>
    %c28 = arith.constant 28 : index
    %760 = memref.load %arg7[%c28] : memref<144xf32, #tpu.memory_space<smem>>
    %761 = vector.broadcast %760 : f32 to vector<8x256xf32>
    %762 = arith.mulf %761, %759 : vector<8x256xf32>
    %763 = arith.addf %747, %762 : vector<8x256xf32>
    %c29 = arith.constant 29 : index
    %764 = memref.load %arg7[%c29] : memref<144xf32, #tpu.memory_space<smem>>
    %765 = vector.broadcast %764 : f32 to vector<8x256xf32>
    %766 = arith.mulf %765, %759 : vector<8x256xf32>
    %767 = arith.addf %750, %766 : vector<8x256xf32>
    %c30 = arith.constant 30 : index
    %768 = memref.load %arg7[%c30] : memref<144xf32, #tpu.memory_space<smem>>
    %769 = vector.broadcast %768 : f32 to vector<8x256xf32>
    %770 = arith.mulf %769, %759 : vector<8x256xf32>
    %771 = arith.addf %753, %770 : vector<8x256xf32>
    %c31 = arith.constant 31 : index
    %772 = memref.load %arg7[%c31] : memref<144xf32, #tpu.memory_space<smem>>
    %773 = vector.broadcast %772 : f32 to vector<8x256xf32>
    %774 = arith.mulf %773, %759 : vector<8x256xf32>
    %775 = arith.addf %756, %774 : vector<8x256xf32>
    %c15_i32_94 = arith.constant 15 : i32
    %776 = tpu.dynamic_rotate %17 by %c15_i32_94 dim 1 : vector<8x256xf32>, i32 -> vector<8x256xf32>
    %777 = vector.broadcast %2 : vector<1x256xf32> to vector<8x256xf32>
    %778 = arith.mulf %776, %777 : vector<8x256xf32>
    %c44 = arith.constant 44 : index
    %779 = memref.load %arg7[%c44] : memref<144xf32, #tpu.memory_space<smem>>
    %780 = vector.broadcast %779 : f32 to vector<8x256xf32>
    %781 = arith.mulf %780, %778 : vector<8x256xf32>
    %782 = arith.addf %763, %781 : vector<8x256xf32>
    %c45 = arith.constant 45 : index
    %783 = memref.load %arg7[%c45] : memref<144xf32, #tpu.memory_space<smem>>
    %784 = vector.broadcast %783 : f32 to vector<8x256xf32>
    %785 = arith.mulf %784, %778 : vector<8x256xf32>
    %786 = arith.addf %767, %785 : vector<8x256xf32>
    %c46 = arith.constant 46 : index
    %787 = memref.load %arg7[%c46] : memref<144xf32, #tpu.memory_space<smem>>
    %788 = vector.broadcast %787 : f32 to vector<8x256xf32>
    %789 = arith.mulf %788, %778 : vector<8x256xf32>
    %790 = arith.addf %771, %789 : vector<8x256xf32>
    %c47 = arith.constant 47 : index
    %791 = memref.load %arg7[%c47] : memref<144xf32, #tpu.memory_space<smem>>
    %792 = vector.broadcast %791 : f32 to vector<8x256xf32>
    %793 = arith.mulf %792, %778 : vector<8x256xf32>
    %794 = arith.addf %775, %793 : vector<8x256xf32>
    %c1_i32_95 = arith.constant 1 : i32
    %795 = tpu.dynamic_rotate %17 by %c1_i32_95 dim 1 : vector<8x256xf32>, i32 -> vector<8x256xf32>
    %796 = vector.broadcast %3 : vector<1x256xf32> to vector<8x256xf32>
    %797 = arith.mulf %795, %796 : vector<8x256xf32>
    %c60 = arith.constant 60 : index
    %798 = memref.load %arg7[%c60] : memref<144xf32, #tpu.memory_space<smem>>
    %799 = vector.broadcast %798 : f32 to vector<8x256xf32>
    %800 = arith.mulf %799, %797 : vector<8x256xf32>
    %801 = arith.addf %782, %800 : vector<8x256xf32>
    %c61 = arith.constant 61 : index
    %802 = memref.load %arg7[%c61] : memref<144xf32, #tpu.memory_space<smem>>
    %803 = vector.broadcast %802 : f32 to vector<8x256xf32>
    %804 = arith.mulf %803, %797 : vector<8x256xf32>
    %805 = arith.addf %786, %804 : vector<8x256xf32>
    %c62 = arith.constant 62 : index
    %806 = memref.load %arg7[%c62] : memref<144xf32, #tpu.memory_space<smem>>
    %807 = vector.broadcast %806 : f32 to vector<8x256xf32>
    %808 = arith.mulf %807, %797 : vector<8x256xf32>
    %809 = arith.addf %790, %808 : vector<8x256xf32>
    %c63 = arith.constant 63 : index
    %810 = memref.load %arg7[%c63] : memref<144xf32, #tpu.memory_space<smem>>
    %811 = vector.broadcast %810 : f32 to vector<8x256xf32>
    %812 = arith.mulf %811, %797 : vector<8x256xf32>
    %813 = arith.addf %794, %812 : vector<8x256xf32>
    %c76 = arith.constant 76 : index
    %814 = memref.load %arg7[%c76] : memref<144xf32, #tpu.memory_space<smem>>
    %815 = vector.broadcast %814 : f32 to vector<8x256xf32>
    %816 = arith.mulf %815, %17 : vector<8x256xf32>
    %817 = arith.addf %801, %816 : vector<8x256xf32>
    %c77 = arith.constant 77 : index
    %818 = memref.load %arg7[%c77] : memref<144xf32, #tpu.memory_space<smem>>
    %819 = vector.broadcast %818 : f32 to vector<8x256xf32>
    %820 = arith.mulf %819, %17 : vector<8x256xf32>
    %821 = arith.addf %805, %820 : vector<8x256xf32>
    %c78 = arith.constant 78 : index
    %822 = memref.load %arg7[%c78] : memref<144xf32, #tpu.memory_space<smem>>
    %823 = vector.broadcast %822 : f32 to vector<8x256xf32>
    %824 = arith.mulf %823, %17 : vector<8x256xf32>
    %825 = arith.addf %809, %824 : vector<8x256xf32>
    %c79 = arith.constant 79 : index
    %826 = memref.load %arg7[%c79] : memref<144xf32, #tpu.memory_space<smem>>
    %827 = vector.broadcast %826 : f32 to vector<8x256xf32>
    %828 = arith.mulf %827, %17 : vector<8x256xf32>
    %829 = arith.addf %813, %828 : vector<8x256xf32>
    %c255_i32_96 = arith.constant 255 : i32
    %830 = tpu.dynamic_rotate %17 by %c255_i32_96 dim 1 : vector<8x256xf32>, i32 -> vector<8x256xf32>
    %831 = vector.broadcast %4 : vector<1x256xf32> to vector<8x256xf32>
    %832 = arith.mulf %830, %831 : vector<8x256xf32>
    %c92 = arith.constant 92 : index
    %833 = memref.load %arg7[%c92] : memref<144xf32, #tpu.memory_space<smem>>
    %834 = vector.broadcast %833 : f32 to vector<8x256xf32>
    %835 = arith.mulf %834, %832 : vector<8x256xf32>
    %836 = arith.addf %817, %835 : vector<8x256xf32>
    %c93 = arith.constant 93 : index
    %837 = memref.load %arg7[%c93] : memref<144xf32, #tpu.memory_space<smem>>
    %838 = vector.broadcast %837 : f32 to vector<8x256xf32>
    %839 = arith.mulf %838, %832 : vector<8x256xf32>
    %840 = arith.addf %821, %839 : vector<8x256xf32>
    %c94 = arith.constant 94 : index
    %841 = memref.load %arg7[%c94] : memref<144xf32, #tpu.memory_space<smem>>
    %842 = vector.broadcast %841 : f32 to vector<8x256xf32>
    %843 = arith.mulf %842, %832 : vector<8x256xf32>
    %844 = arith.addf %825, %843 : vector<8x256xf32>
    %c95 = arith.constant 95 : index
    %845 = memref.load %arg7[%c95] : memref<144xf32, #tpu.memory_space<smem>>
    %846 = vector.broadcast %845 : f32 to vector<8x256xf32>
    %847 = arith.mulf %846, %832 : vector<8x256xf32>
    %848 = arith.addf %829, %847 : vector<8x256xf32>
    %c241_i32_97 = arith.constant 241 : i32
    %849 = tpu.dynamic_rotate %17 by %c241_i32_97 dim 1 : vector<8x256xf32>, i32 -> vector<8x256xf32>
    %850 = vector.broadcast %5 : vector<1x256xf32> to vector<8x256xf32>
    %851 = arith.mulf %849, %850 : vector<8x256xf32>
    %c108 = arith.constant 108 : index
    %852 = memref.load %arg7[%c108] : memref<144xf32, #tpu.memory_space<smem>>
    %853 = vector.broadcast %852 : f32 to vector<8x256xf32>
    %854 = arith.mulf %853, %851 : vector<8x256xf32>
    %855 = arith.addf %836, %854 : vector<8x256xf32>
    %c109 = arith.constant 109 : index
    %856 = memref.load %arg7[%c109] : memref<144xf32, #tpu.memory_space<smem>>
    %857 = vector.broadcast %856 : f32 to vector<8x256xf32>
    %858 = arith.mulf %857, %851 : vector<8x256xf32>
    %859 = arith.addf %840, %858 : vector<8x256xf32>
    %c110 = arith.constant 110 : index
    %860 = memref.load %arg7[%c110] : memref<144xf32, #tpu.memory_space<smem>>
    %861 = vector.broadcast %860 : f32 to vector<8x256xf32>
    %862 = arith.mulf %861, %851 : vector<8x256xf32>
    %863 = arith.addf %844, %862 : vector<8x256xf32>
    %c111 = arith.constant 111 : index
    %864 = memref.load %arg7[%c111] : memref<144xf32, #tpu.memory_space<smem>>
    %865 = vector.broadcast %864 : f32 to vector<8x256xf32>
    %866 = arith.mulf %865, %851 : vector<8x256xf32>
    %867 = arith.addf %848, %866 : vector<8x256xf32>
    %c240_i32_98 = arith.constant 240 : i32
    %868 = tpu.dynamic_rotate %17 by %c240_i32_98 dim 1 : vector<8x256xf32>, i32 -> vector<8x256xf32>
    %869 = vector.broadcast %6 : vector<1x256xf32> to vector<8x256xf32>
    %870 = arith.mulf %868, %869 : vector<8x256xf32>
    %c124 = arith.constant 124 : index
    %871 = memref.load %arg7[%c124] : memref<144xf32, #tpu.memory_space<smem>>
    %872 = vector.broadcast %871 : f32 to vector<8x256xf32>
    %873 = arith.mulf %872, %870 : vector<8x256xf32>
    %874 = arith.addf %855, %873 : vector<8x256xf32>
    %c125 = arith.constant 125 : index
    %875 = memref.load %arg7[%c125] : memref<144xf32, #tpu.memory_space<smem>>
    %876 = vector.broadcast %875 : f32 to vector<8x256xf32>
    %877 = arith.mulf %876, %870 : vector<8x256xf32>
    %878 = arith.addf %859, %877 : vector<8x256xf32>
    %c126 = arith.constant 126 : index
    %879 = memref.load %arg7[%c126] : memref<144xf32, #tpu.memory_space<smem>>
    %880 = vector.broadcast %879 : f32 to vector<8x256xf32>
    %881 = arith.mulf %880, %870 : vector<8x256xf32>
    %882 = arith.addf %863, %881 : vector<8x256xf32>
    %c127 = arith.constant 127 : index
    %883 = memref.load %arg7[%c127] : memref<144xf32, #tpu.memory_space<smem>>
    %884 = vector.broadcast %883 : f32 to vector<8x256xf32>
    %885 = arith.mulf %884, %870 : vector<8x256xf32>
    %886 = arith.addf %867, %885 : vector<8x256xf32>
    %c239_i32_99 = arith.constant 239 : i32
    %887 = tpu.dynamic_rotate %17 by %c239_i32_99 dim 1 : vector<8x256xf32>, i32 -> vector<8x256xf32>
    %888 = vector.broadcast %7 : vector<1x256xf32> to vector<8x256xf32>
    %889 = arith.mulf %887, %888 : vector<8x256xf32>
    %c140 = arith.constant 140 : index
    %890 = memref.load %arg7[%c140] : memref<144xf32, #tpu.memory_space<smem>>
    %891 = vector.broadcast %890 : f32 to vector<8x256xf32>
    %892 = arith.mulf %891, %889 : vector<8x256xf32>
    %893 = arith.addf %874, %892 : vector<8x256xf32>
    %c141 = arith.constant 141 : index
    %894 = memref.load %arg7[%c141] : memref<144xf32, #tpu.memory_space<smem>>
    %895 = vector.broadcast %894 : f32 to vector<8x256xf32>
    %896 = arith.mulf %895, %889 : vector<8x256xf32>
    %897 = arith.addf %878, %896 : vector<8x256xf32>
    %c142 = arith.constant 142 : index
    %898 = memref.load %arg7[%c142] : memref<144xf32, #tpu.memory_space<smem>>
    %899 = vector.broadcast %898 : f32 to vector<8x256xf32>
    %900 = arith.mulf %899, %889 : vector<8x256xf32>
    %901 = arith.addf %882, %900 : vector<8x256xf32>
    %c143 = arith.constant 143 : index
    %902 = memref.load %arg7[%c143] : memref<144xf32, #tpu.memory_space<smem>>
    %903 = vector.broadcast %902 : f32 to vector<8x256xf32>
    %904 = arith.mulf %903, %889 : vector<8x256xf32>
    %905 = arith.addf %886, %904 : vector<8x256xf32>
    %906 = vector.broadcast %205 : vector<8x1xf32> to vector<8x256xf32>
    %907 = arith.mulf %906, %893 : vector<8x256xf32>
    %908 = arith.addf %732, %907 : vector<8x256xf32>
    %909 = vector.broadcast %205 : vector<8x1xf32> to vector<8x256xf32>
    %910 = arith.mulf %909, %897 : vector<8x256xf32>
    %911 = arith.addf %735, %910 : vector<8x256xf32>
    %912 = vector.broadcast %205 : vector<8x1xf32> to vector<8x256xf32>
    %913 = arith.mulf %912, %901 : vector<8x256xf32>
    %914 = arith.addf %738, %913 : vector<8x256xf32>
    %915 = vector.broadcast %205 : vector<8x1xf32> to vector<8x256xf32>
    %916 = arith.mulf %915, %905 : vector<8x256xf32>
    %917 = arith.addf %741, %916 : vector<8x256xf32>
    %918 = arith.index_cast %9 : i32 to index
    %c0_100 = arith.constant 0 : index
    %919 = vector.load %arg9[%918, %c0_100] : memref<8x1024xf32, #tpu.memory_space<vmem>>, vector<8x256xf32>
    tpu.vector_store %arg9[%918, %c0_100], %908 {strides = array<i32>} : memref<8x1024xf32, #tpu.memory_space<vmem>>, vector<8x256xf32>,
    %920 = arith.index_cast %9 : i32 to index
    %c256_101 = arith.constant 256 : index
    %921 = vector.load %arg9[%920, %c256_101] : memref<8x1024xf32, #tpu.memory_space<vmem>>, vector<8x256xf32>
    tpu.vector_store %arg9[%920, %c256_101], %911 {strides = array<i32>} : memref<8x1024xf32, #tpu.memory_space<vmem>>, vector<8x256xf32>,
    %922 = arith.index_cast %9 : i32 to index
    %c512_102 = arith.constant 512 : index
    %923 = vector.load %arg9[%922, %c512_102] : memref<8x1024xf32, #tpu.memory_space<vmem>>, vector<8x256xf32>
    tpu.vector_store %arg9[%922, %c512_102], %914 {strides = array<i32>} : memref<8x1024xf32, #tpu.memory_space<vmem>>, vector<8x256xf32>,
    %924 = arith.index_cast %9 : i32 to index
    %c768_103 = arith.constant 768 : index
    %925 = vector.load %arg9[%924, %c768_103] : memref<8x1024xf32, #tpu.memory_space<vmem>>, vector<8x256xf32>
    tpu.vector_store %arg9[%924, %c768_103], %917 {strides = array<i32>} : memref<8x1024xf32, #tpu.memory_space<vmem>>, vector<8x256xf32>,
    %c1_i32_104 = arith.constant 1 : i32
    return
  }
  func.func @transform_0(%arg0: i32) -> (i32, i32) {
    %c0_i32 = arith.constant 0 : i32
    %c0_i32_0 = arith.constant 0 : i32
    return %arg0, %c0_i32 : i32, i32
  }
  func.func @transform_1(%arg0: i32) -> (i32, i32) {
    %c0_i32 = arith.constant 0 : i32
    %c0_i32_0 = arith.constant 0 : i32
    %c0_i32_1 = arith.constant 0 : i32
    return %c0_i32, %c0_i32_0 : i32, i32
  }
  func.func @transform_2(%arg0: i32) -> i32 {
    %c0_i32 = arith.constant 0 : i32
    %c0_i32_0 = arith.constant 0 : i32
    return %c0_i32 : i32
  }
  func.func @transform_3(%arg0: i32) -> i32 {
    %c0_i32 = arith.constant 0 : i32
    %c0_i32_0 = arith.constant 0 : i32
    return %c0_i32 : i32
  }
  func.func @transform_4(%arg0: i32) -> i32 {
    %c0_i32 = arith.constant 0 : i32
    %c0_i32_0 = arith.constant 0 : i32
    return %c0_i32 : i32
  }
  func.func @transform_5(%arg0: i32) -> i32 {
    %c0_i32 = arith.constant 0 : i32
    %c0_i32_0 = arith.constant 0 : i32
    return %c0_i32 : i32
  }
  func.func @transform_6(%arg0: i32) -> i32 {
    %c0_i32 = arith.constant 0 : i32
    %c0_i32_0 = arith.constant 0 : i32
    return %c0_i32 : i32
  }
  func.func @transform_7(%arg0: i32) -> i32 {
    %c0_i32 = arith.constant 0 : i32
    %c0_i32_0 = arith.constant 0 : i32
    return %c0_i32 : i32
  }
  func.func @transform_8(%arg0: i32) -> (i32, i32) {
    %c0_i32 = arith.constant 0 : i32
    %c0_i32_0 = arith.constant 0 : i32
    return %arg0, %c0_i32 : i32, i32
  }
}

</mosaic_0001>

<llo_original>
// kernel: se_layer_forward.1
$region0: #{se_layer_forward.1}
  #allocation0 [shape = 'u32[]', space=smem, size = 0x4, offset = 0x4, fixed_abs, tag = 'smem constant byte address 0x4 - core index']
  #allocation1 [shape = 'u32[144,128]{1,0:T(1,128)}', space=vmem, size = 0x12000, scoped, tag = 'internal scratch']
  %s0 = inlined_call_operand.vmem [shape: f32[8,1024], index: 0, kind: input, shape index: {}]
  %s1 = inlined_call_operand.vmem [shape: f32[9,256], index: 1, kind: input, shape index: {}]
  %s2 = inlined_call_operand.vmem [shape: f32[16], index: 2, kind: input, shape index: {}]
  %s3 = inlined_call_operand.vmem [shape: f32[4], index: 3, kind: input, shape index: {}]
  %s4 = inlined_call_operand.vmem [shape: f32[16], index: 4, kind: input, shape index: {}]
  %s5 = inlined_call_operand.vmem [shape: f32[4], index: 5, kind: input, shape index: {}]
  %s6 = inlined_call_operand.vmem [shape: f32[144], index: 6, kind: input, shape index: {}]
  %s7 = inlined_call_operand.vmem [shape: f32[4], index: 7, kind: input, shape index: {}]
  %s8 = inlined_call_operand.vmem [shape: f32[8,1024], index: 8, kind: output, shape index: {}]
  %s9 = sld [smem:[#allocation0]]
  $region66: #{se_layer_forward.1} parent=0
    _
  %s11 = ssub.s32 1, %s9
  %s12 = scalar_select 0, %s11, %s9
  $region1: #{se_layer_forward.1} parent=0
    #allocation2 [shape = 'u8[512]{0}', space=smem, size = 0x200, scoped, tag = 'input window, operand 2, single buffered']
    #allocation3 [shape = 's32[1]{0}', space=sflag, size = 0x4, scoped, tag = 'scoped memory for se_layer_forward.1']
    #allocation4 [shape = 'u8[512]{0}', space=smem, size = 0x200, scoped, tag = 'input window, operand 3, single buffered']
    #allocation5 [shape = 's32[1]{0}', space=sflag, size = 0x4, scoped, tag = 'scoped memory for se_layer_forward.1']
    #allocation6 [shape = 'u8[512]{0}', space=smem, size = 0x200, scoped, tag = 'input window, operand 4, single buffered']
    #allocation7 [shape = 'u8[512]{0}', space=smem, size = 0x200, scoped, tag = 'input window, operand 5, single buffered']
    #allocation8 [shape = 's32[1]{0}', space=sflag, size = 0x4, scoped, tag = 'scoped memory for se_layer_forward.1']
    #allocation9 [shape = 'u8[1024]{0}', space=smem, size = 0x400, scoped, tag = 'input window, operand 6, single buffered']
    #allocation10 [shape = 'u8[512]{0}', space=smem, size = 0x200, scoped, tag = 'input window, operand 7, single buffered']
    #allocation11 [shape = 's32[1]{0}', space=sflag, size = 0x4, scoped, tag = 'scoped memory for se_layer_forward.1']
    %13 = vsyncpa [#allocation3], 0
    %14 = vsyncpa [#allocation5], 0
    %15 = vsyncpa [#allocation8], 0
    %16 = vsyncpa [#allocation11], 0
    // Predicated region
    $region2: #{se_layer_forward.1} parent=1 // pred_check
      _
    $region3: #{se_layer_forward.1} parent=1 // pred_check_branch
      %18 = sbr.rel (0) target = $region5
    $region4: #{se_layer_forward.1} parent=1 // pred_region
      _
    $region5: #{se_layer_forward.1} parent=1 // pred_fallthru
      _
    // Predicated region
    $region6: #{se_layer_forward.1} parent=1 // pred_check
      _
    $region7: #{se_layer_forward.1} parent=1 // pred_check_branch
      %20 = sbr.rel (0) target = $region9
    $region8: #{se_layer_forward.1} parent=1 // pred_region
      _
    $region9: #{se_layer_forward.1} parent=1 // pred_fallthru
      _
    // Predicated region
    $region10: #{se_layer_forward.1} parent=1 // pred_check
      _
    $region11: #{se_layer_forward.1} parent=1 // pred_check_branch
      %22 = sbr.rel (0) target = $region13
    $region12: #{se_layer_forward.1} parent=1 // pred_region
      %s24 = ssub.s32 16, 16
      %25 = vsyncadd [#allocation3], %s24
      %s27 = sshll.u32 %s2, 4
      %s28 = int_to_ptr.vmem [resolvable:$true] %s27
      %30 = dma.vmem_to_smem %s28, 16, [#allocation2], [#allocation3]
    $region13: #{se_layer_forward.1} parent=1 // pred_fallthru
      _
    // Predicated region
    $region14: #{se_layer_forward.1} parent=1 // pred_check
      _
    $region15: #{se_layer_forward.1} parent=1 // pred_check_branch
      %32 = sbr.rel (0) target = $region17
    $region16: #{se_layer_forward.1} parent=1 // pred_region
      %s34 = ssub.s32 16, 16
      %35 = vsyncadd [#allocation5], %s34
      %s37 = sshll.u32 %s3, 4
      %s38 = int_to_ptr.vmem [resolvable:$true] %s37
      %40 = dma.vmem_to_smem %s38, 16, [#allocation4], [#allocation5]
    $region17: #{se_layer_forward.1} parent=1 // pred_fallthru
      _
    // Predicated region
    $region18: #{se_layer_forward.1} parent=1 // pred_check
      _
    $region19: #{se_layer_forward.1} parent=1 // pred_check_branch
      %42 = sbr.rel (0) target = $region21
    $region20: #{se_layer_forward.1} parent=1 // pred_region
      %s44 = ssub.s32 16, 16
      %45 = vsyncadd [#allocation5], %s44
      %s47 = sshll.u32 %s4, 4
      %s48 = int_to_ptr.vmem [resolvable:$true] %s47
      %50 = dma.vmem_to_smem %s48, 16, [#allocation6], [#allocation5]
    $region21: #{se_layer_forward.1} parent=1 // pred_fallthru
      _
    // Predicated region
    $region22: #{se_layer_forward.1} parent=1 // pred_check
      _
    $region23: #{se_layer_forward.1} parent=1 // pred_check_branch
      %52 = sbr.rel (0) target = $region25
    $region24: #{se_layer_forward.1} parent=1 // pred_region
      %s54 = ssub.s32 16, 16
      %55 = vsyncadd [#allocation8], %s54
      %s57 = sshll.u32 %s5, 4
      %s58 = int_to_ptr.vmem [resolvable:$true] %s57
      %60 = dma.vmem_to_smem %s58, 16, [#allocation7], [#allocation8]
    $region25: #{se_layer_forward.1} parent=1 // pred_fallthru
      _
    // Predicated region
    $region26: #{se_layer_forward.1} parent=1 // pred_check
      _
    $region27: #{se_layer_forward.1} parent=1 // pred_check_branch
      %62 = sbr.rel (0) target = $region29
    $region28: #{se_layer_forward.1} parent=1 // pred_region
      %s64 = ssub.s32 32, 32
      %65 = vsyncadd [#allocation8], %s64
      %s67 = sshll.u32 %s6, 4
      %s68 = int_to_ptr.vmem [resolvable:$true] %s67
      %70 = dma.vmem_to_smem %s68, 32, [#allocation9], [#allocation8]
    $region29: #{se_layer_forward.1} parent=1 // pred_fallthru
      _
    // Predicated region
    $region30: #{se_layer_forward.1} parent=1 // pred_check
      _
    $region31: #{se_layer_forward.1} parent=1 // pred_check_branch
      %72 = sbr.rel (0) target = $region33
    $region32: #{se_layer_forward.1} parent=1 // pred_region
      %s74 = ssub.s32 16, 16
      %75 = vsyncadd [#allocation11], %s74
      %s77 = sshll.u32 %s7, 4
      %s78 = int_to_ptr.vmem [resolvable:$true] %s77
      %80 = dma.vmem_to_smem %s78, 16, [#allocation10], [#allocation11]
    $region33: #{se_layer_forward.1} parent=1 // pred_fallthru
      _
    // Predicated region
    $region34: #{se_layer_forward.1} parent=1 // pred_check
      _
    $region35: #{se_layer_forward.1} parent=1 // pred_check_branch
      %82 = sbr.rel (0) target = $region37
    $region36: #{se_layer_forward.1} parent=1 // pred_region
      %83 = dma.done [#allocation3], 16
    $region37: #{se_layer_forward.1} parent=1 // pred_fallthru
      _
    // Predicated region
    $region38: #{se_layer_forward.1} parent=1 // pred_check
      _
    $region39: #{se_layer_forward.1} parent=1 // pred_check_branch
      %85 = sbr.rel (0) target = $region41
    $region40: #{se_layer_forward.1} parent=1 // pred_region
      %86 = dma.done [#allocation5], 16
    $region41: #{se_layer_forward.1} parent=1 // pred_fallthru
      _
    // Predicated region
    $region42: #{se_layer_forward.1} parent=1 // pred_check
      _
    $region43: #{se_layer_forward.1} parent=1 // pred_check_branch
      %88 = sbr.rel (0) target = $region45
    $region44: #{se_layer_forward.1} parent=1 // pred_region
      %89 = dma.done [#allocation5], 16
    $region45: #{se_layer_forward.1} parent=1 // pred_fallthru
      _
    // Predicated region
    $region46: #{se_layer_forward.1} parent=1 // pred_check
      _
    $region47: #{se_layer_forward.1} parent=1 // pred_check_branch
      %91 = sbr.rel (0) target = $region49
    $region48: #{se_layer_forward.1} parent=1 // pred_region
      %92 = dma.done [#allocation8], 16
    $region49: #{se_layer_forward.1} parent=1 // pred_fallthru
      _
    // Predicated region
    $region50: #{se_layer_forward.1} parent=1 // pred_check
      _
    $region51: #{se_layer_forward.1} parent=1 // pred_check_branch
      %94 = sbr.rel (0) target = $region53
    $region52: #{se_layer_forward.1} parent=1 // pred_region
      %95 = dma.done [#allocation8], 32
    $region53: #{se_layer_forward.1} parent=1 // pred_fallthru
      _
    // Predicated region
    $region54: #{se_layer_forward.1} parent=1 // pred_check
      _
    $region55: #{se_layer_forward.1} parent=1 // pred_check_branch
      %97 = sbr.rel (0) target = $region57
    $region56: #{se_layer_forward.1} parent=1 // pred_region
      %98 = dma.done [#allocation11], 16
    $region57: #{se_layer_forward.1} parent=1 // pred_fallthru
      _
    %99 = sfence
    %v100 = vld [vmem:[%s1] ss:$8 sm:$0x3]
    %s101 = scalar_lea.vmem %s1, 1
    %v102 = vld [vmem:[%s101] ss:$8 sm:$0x3]
    %s103 = scalar_lea.vmem %s1, 2
    %v104 = vld [vmem:[%s103] ss:$8 sm:$0x3]
    %s105 = scalar_lea.vmem %s1, 3
    %v106 = vld [vmem:[%s105] ss:$8 sm:$0x3]
    %s107 = scalar_lea.vmem %s1, 5
    %v108 = vld [vmem:[%s107] ss:$8 sm:$0x3]
    %s109 = scalar_lea.vmem %s1, 6
    %v110 = vld [vmem:[%s109] ss:$8 sm:$0x3]
    %s111 = scalar_lea.vmem %s1, 7
    %v112 = vld [vmem:[%s111] ss:$8 sm:$0x3]
    %s113 = scalar_lea.vmem %s1, 16
    %v114 = vld [vmem:[%s113] ss:$8 sm:$0x3]
    %s115 = smul.u32 0, 8
    %s116 = smul.addr %s115, 8
    %s117 = scalar_lea.vmem %s0, %s116
    %v118 = vld [vmem:[%s117] sm:$0xff]
    %v119 = vld [vmem:[%s117 + $0x8] sm:$0xff]
    %v120 = vld [vmem:[%s117 + $0x10] sm:$0xff]
    %v121 = vld [vmem:[%s117 + $0x18] sm:$0xff]
    %v122 = vld [vmem:[%s117 + $0x20] sm:$0xff]
    %v123 = vld [vmem:[%s117 + $0x28] sm:$0xff]
    %v124 = vld [vmem:[%s117 + $0x30] sm:$0xff]
    %v125 = vld [vmem:[%s117 + $0x38] sm:$0xff]
    %v126 = vadd.f32 %v118, %v119
    %127 = vadd.xlane.f32.xlu0 %v126
    %v128 = vpop.xlane.xlu0 %127
    %v129 = vmul.f32 %v128, 0.00390625
    %v130 = vadd.f32 %v120, %v121
    %131 = vadd.xlane.f32.xlu0 %v130
    %v132 = vpop.xlane.xlu0 %131
    %v133 = vmul.f32 %v132, 0.00390625
    %v134 = vadd.f32 %v122, %v123
    %135 = vadd.xlane.f32.xlu0 %v134
    %v136 = vpop.xlane.xlu0 %135
    %v137 = vmul.f32 %v136, 0.00390625
    %v138 = vadd.f32 %v124, %v125
    %139 = vadd.xlane.f32.xlu0 %v138
    %v140 = vpop.xlane.xlu0 %139
    %v141 = vmul.f32 %v140, 0.00390625
    %s142 = sld [smem:[#allocation2]]
    %v143 = vstv %s142
    %v144 = vmul.f32 %v129, %v143
    %s145 = sld [smem:[#allocation2 + $0x4]]
    %v146 = vstv %s145
    %v147 = vmul.f32 %v133, %v146
    %v148 = vadd.f32 %v144, %v147
    %s149 = sld [smem:[#allocation2 + $0x8]]
    %v150 = vstv %s149
    %v151 = vmul.f32 %v137, %v150
    %v152 = vadd.f32 %v148, %v151
    %s153 = sld [smem:[#allocation2 + $0xc]]
    %v154 = vstv %s153
    %v155 = vmul.f32 %v141, %v154
    %v156 = vadd.f32 %v152, %v155
    %s157 = sld [smem:[#allocation4]]
    %v158 = vstv %s157
    %v159 = vadd.f32 %v156, %v158
    %v160 = vmax.f32 %v159, 0.0
    %s161 = sld [smem:[#allocation2 + $0x1]]
    %v162 = vstv %s161
    %v163 = vmul.f32 %v129, %v162
    %s164 = sld [smem:[#allocation2 + $0x5]]
    %v165 = vstv %s164
    %v166 = vmul.f32 %v133, %v165
    %v167 = vadd.f32 %v163, %v166
    %s168 = sld [smem:[#allocation2 + $0x9]]
    %v169 = vstv %s168
    %v170 = vmul.f32 %v137, %v169
    %v171 = vadd.f32 %v167, %v170
    %s172 = sld [smem:[#allocation2 + $0xd]]
    %v173 = vstv %s172
    %v174 = vmul.f32 %v141, %v173
    %v175 = vadd.f32 %v171, %v174
    %s176 = sld [smem:[#allocation4 + $0x1]]
    %v177 = vstv %s176
    %v178 = vadd.f32 %v175, %v177
    %v179 = vmax.f32 %v178, 0.0
    %s180 = sld [smem:[#allocation2 + $0x2]]
    %v181 = vstv %s180
    %v182 = vmul.f32 %v129, %v181
    %s183 = sld [smem:[#allocation2 + $0x6]]
    %v184 = vstv %s183
    %v185 = vmul.f32 %v133, %v184
    %v186 = vadd.f32 %v182, %v185
    %s187 = sld [smem:[#allocation2 + $0xa]]
    %v188 = vstv %s187
    %v189 = vmul.f32 %v137, %v188
    %v190 = vadd.f32 %v186, %v189
    %s191 = sld [smem:[#allocation2 + $0xe]]
    %v192 = vstv %s191
    %v193 = vmul.f32 %v141, %v192
    %v194 = vadd.f32 %v190, %v193
    %s195 = sld [smem:[#allocation4 + $0x2]]
    %v196 = vstv %s195
    %v197 = vadd.f32 %v194, %v196
    %v198 = vmax.f32 %v197, 0.0
    %s199 = sld [smem:[#allocation2 + $0x3]]
    %v200 = vstv %s199
    %v201 = vmul.f32 %v129, %v200
    %s202 = sld [smem:[#allocation2 + $0x7]]
    %v203 = vstv %s202
    %v204 = vmul.f32 %v133, %v203
    %v205 = vadd.f32 %v201, %v204
    %s206 = sld [smem:[#allocation2 + $0xb]]
    %v207 = vstv %s206
    %v208 = vmul.f32 %v137, %v207
    %v209 = vadd.f32 %v205, %v208
    %s210 = sld [smem:[#allocation2 + $0xf]]
    %v211 = vstv %s210
    %v212 = vmul.f32 %v141, %v211
    %v213 = vadd.f32 %v209, %v212
    %s214 = sld [smem:[#allocation4 + $0x3]]
    %v215 = vstv %s214
    %v216 = vadd.f32 %v213, %v215
    %v217 = vmax.f32 %v216, 0.0
    %s218 = sld [smem:[#allocation6]]
    %v219 = vstv %s218
    %v220 = vmul.f32 %v160, %v219
    %s221 = sld [smem:[#allocation6 + $0x4]]
    %v222 = vstv %s221
    %v223 = vmul.f32 %v179, %v222
    %v224 = vadd.f32 %v220, %v223
    %s225 = sld [smem:[#allocation6 + $0x8]]
    %v226 = vstv %s225
    %v227 = vmul.f32 %v198, %v226
    %v228 = vadd.f32 %v224, %v227
    %s229 = sld [smem:[#allocation6 + $0xc]]
    %v230 = vstv %s229
    %v231 = vmul.f32 %v217, %v230
    %v232 = vadd.f32 %v228, %v231
    %s233 = sld [smem:[#allocation7]]
    %v234 = vstv %s233
    %v235 = vadd.f32 %v232, %v234
    %v236 = vxor.u32 %v235, 2147483648
    %v237 = vmul.f32 %v236, 1.442695
    %v238 = vpow.pop %v237
    %v239 = vadd.f32 %v238, 1.0
    %v240 = vrcp.pop %v239
    %v241 = vmul.f32 1.0, %v240
    %s242 = sld [smem:[#allocation6 + $0x1]]
    %v243 = vstv %s242
    %v244 = vmul.f32 %v160, %v243
    %s245 = sld [smem:[#allocation6 + $0x5]]
    %v246 = vstv %s245
    %v247 = vmul.f32 %v179, %v246
    %v248 = vadd.f32 %v244, %v247
    %s249 = sld [smem:[#allocation6 + $0x9]]
    %v250 = vstv %s249
    %v251 = vmul.f32 %v198, %v250
    %v252 = vadd.f32 %v248, %v251
    %s253 = sld [smem:[#allocation6 + $0xd]]
    %v254 = vstv %s253
    %v255 = vmul.f32 %v217, %v254
    %v256 = vadd.f32 %v252, %v255
    %s257 = sld [smem:[#allocation7 + $0x1]]
    %v258 = vstv %s257
    %v259 = vadd.f32 %v256, %v258
    %v260 = vxor.u32 %v259, 2147483648
    %v261 = vmul.f32 %v260, 1.442695
    %v262 = vpow.pop %v261
    %v263 = vadd.f32 %v262, 1.0
    %v264 = vrcp.pop %v263
    %v265 = vmul.f32 1.0, %v264
    %s266 = sld [smem:[#allocation6 + $0x2]]
    %v267 = vstv %s266
    %v268 = vmul.f32 %v160, %v267
    %s269 = sld [smem:[#allocation6 + $0x6]]
    %v270 = vstv %s269
    %v271 = vmul.f32 %v179, %v270
    %v272 = vadd.f32 %v268, %v271
    %s273 = sld [smem:[#allocation6 + $0xa]]
    %v274 = vstv %s273
    %v275 = vmul.f32 %v198, %v274
    %v276 = vadd.f32 %v272, %v275
    %s277 = sld [smem:[#allocation6 + $0xe]]
    %v278 = vstv %s277
    %v279 = vmul.f32 %v217, %v278
    %v280 = vadd.f32 %v276, %v279
    %s281 = sld [smem:[#allocation7 + $0x2]]
    %v282 = vstv %s281
    %v283 = vadd.f32 %v280, %v282
    %v284 = vxor.u32 %v283, 2147483648
    %v285 = vmul.f32 %v284, 1.442695
    %v286 = vpow.pop %v285
    %v287 = vadd.f32 %v286, 1.0
    %v288 = vrcp.pop %v287
    %v289 = vmul.f32 1.0, %v288
    %s290 = sld [smem:[#allocation6 + $0x3]]
    %v291 = vstv %s290
    %v292 = vmul.f32 %v160, %v291
    %s293 = sld [smem:[#allocation6 + $0x7]]
    %v294 = vstv %s293
    %v295 = vmul.f32 %v179, %v294
    %v296 = vadd.f32 %v292, %v295
    %s297 = sld [smem:[#allocation6 + $0xb]]
    %v298 = vstv %s297
    %v299 = vmul.f32 %v198, %v298
    %v300 = vadd.f32 %v296, %v299
    %s301 = sld [smem:[#allocation6 + $0xf]]
    %v302 = vstv %s301
    %v303 = vmul.f32 %v217, %v302
    %v304 = vadd.f32 %v300, %v303
    %s305 = sld [smem:[#allocation7 + $0x3]]
    %v306 = vstv %s305
    %v307 = vadd.f32 %v304, %v306
    %v308 = vxor.u32 %v307, 2147483648
    %v309 = vmul.f32 %v308, 1.442695
    %v310 = vpow.pop %v309
    %v311 = vadd.f32 %v310, 1.0
    %v312 = vrcp.pop %v311
    %v313 = vmul.f32 1.0, %v312
    %s314 = sld [smem:[#allocation10]]
    %v315 = vstv %s314
    %s316 = sld [smem:[#allocation10 + $0x1]]
    %v317 = vstv %s316
    %s318 = sld [smem:[#allocation10 + $0x2]]
    %v319 = vstv %s318
    %s320 = sld [smem:[#allocation10 + $0x3]]
    %v321 = vstv %s320
    %322 = vrot.lane.b32.xlu0 %v118, 17
    %v323 = vpop.permute.xlu0 %322
    %324 = vrot.lane.b32.xlu0 %v119, 17
    %v325 = vpop.permute.xlu0 %324
    %v326 = vlaneseq
    %v327 = vand.u32 %v326, 127
    %vm328 = vcmp.lt.s32.totalorder %v327, 17
    %v329 = vsel %vm328, %v323, %v325
    %v330 = vsel %vm328, %v325, %v323
    %v332 = vlaneseq
    %v333 = vshrl.u32 %v332, 7
    %v334 = vsub.s32 0, %v333
    %v335 = vrot.slane %v100, %v334
    %v336 = vlaneseq
    %v337 = vshrl.u32 %v336, 7
    %v338 = vsub.s32 1, %v337
    %v339 = vrot.slane %v100, %v338
    %v342 = vmul.f32 %v330, %v335
    %v343 = vmul.f32 %v329, %v339
    %s344 = sld [smem:[#allocation9]]
    %v345 = vstv %s344
    %v346 = vmul.f32 %v345, %v342
    %v347 = vmul.f32 %v345, %v343
    %s348 = sld [smem:[#allocation9 + $0x1]]
    %v349 = vstv %s348
    %v350 = vmul.f32 %v349, %v342
    %v351 = vmul.f32 %v349, %v343
    %s352 = sld [smem:[#allocation9 + $0x2]]
    %v353 = vstv %s352
    %v354 = vmul.f32 %v353, %v342
    %v355 = vmul.f32 %v353, %v343
    %s356 = sld [smem:[#allocation9 + $0x3]]
    %v357 = vstv %s356
    %v358 = vmul.f32 %v357, %v342
    %v359 = vmul.f32 %v357, %v343
    %360 = vrot.lane.b32.xlu0 %v118, 16
    %v361 = vpop.permute.xlu0 %360
    %362 = vrot.lane.b32.xlu0 %v119, 16
    %v363 = vpop.permute.xlu0 %362
    %vm364 = vcmp.lt.s32.totalorder %v327, 16
    %v365 = vsel %vm364, %v361, %v363
    %v366 = vsel %vm364, %v363, %v361
    %v368 = vlaneseq
    %v369 = vshrl.u32 %v368, 7
    %v370 = vsub.s32 0, %v369
    %v371 = vrot.slane %v102, %v370
    %v372 = vlaneseq
    %v373 = vshrl.u32 %v372, 7
    %v374 = vsub.s32 1, %v373
    %v375 = vrot.slane %v102, %v374
    %v378 = vmul.f32 %v366, %v371
    %v379 = vmul.f32 %v365, %v375
    %s380 = sld [smem:[#allocation9 + $0x10]]
    %v381 = vstv %s380
    %v382 = vmul.f32 %v381, %v378
    %v383 = vmul.f32 %v381, %v379
    %v384 = vadd.f32 %v346, %v382
    %v385 = vadd.f32 %v347, %v383
    %s386 = sld [smem:[#allocation9 + $0x11]]
    %v387 = vstv %s386
    %v388 = vmul.f32 %v387, %v378
    %v389 = vmul.f32 %v387, %v379
    %v390 = vadd.f32 %v350, %v388
    %v391 = vadd.f32 %v351, %v389
    %s392 = sld [smem:[#allocation9 + $0x12]]
    %v393 = vstv %s392
    %v394 = vmul.f32 %v393, %v378
    %v395 = vmul.f32 %v393, %v379
    %v396 = vadd.f32 %v354, %v394
    %v397 = vadd.f32 %v355, %v395
    %s398 = sld [smem:[#allocation9 + $0x13]]
    %v399 = vstv %s398
    %v400 = vmul.f32 %v399, %v378
    %v401 = vmul.f32 %v399, %v379
    %v402 = vadd.f32 %v358, %v400
    %v403 = vadd.f32 %v359, %v401
    %404 = vrot.lane.b32.xlu0 %v118, 15
    %v405 = vpop.permute.xlu0 %404
    %406 = vrot.lane.b32.xlu0 %v119, 15
    %v407 = vpop.permute.xlu0 %406
    %vm408 = vcmp.lt.s32.totalorder %v327, 15
    %v409 = vsel %vm408, %v405, %v407
    %v410 = vsel %vm408, %v407, %v405
    %v412 = vlaneseq
    %v413 = vshrl.u32 %v412, 7
    %v414 = vsub.s32 0, %v413
    %v415 = vrot.slane %v104, %v414
    %v416 = vlaneseq
    %v417 = vshrl.u32 %v416, 7
    %v418 = vsub.s32 1, %v417
    %v419 = vrot.slane %v104, %v418
    %v422 = vmul.f32 %v410, %v415
    %v423 = vmul.f32 %v409, %v419
    %s424 = sld [smem:[#allocation9 + $0x20]]
    %v425 = vstv %s424
    %v426 = vmul.f32 %v425, %v422
    %v427 = vmul.f32 %v425, %v423
    %v428 = vadd.f32 %v384, %v426
    %v429 = vadd.f32 %v385, %v427
    %s430 = sld [smem:[#allocation9 + $0x21]]
    %v431 = vstv %s430
    %v432 = vmul.f32 %v431, %v422
    %v433 = vmul.f32 %v431, %v423
    %v434 = vadd.f32 %v390, %v432
    %v435 = vadd.f32 %v391, %v433
    %s436 = sld [smem:[#allocation9 + $0x22]]
    %v437 = vstv %s436
    %v438 = vmul.f32 %v437, %v422
    %v439 = vmul.f32 %v437, %v423
    %v440 = vadd.f32 %v396, %v438
    %v441 = vadd.f32 %v397, %v439
    %s442 = sld [smem:[#allocation9 + $0x23]]
    %v443 = vstv %s442
    %v444 = vmul.f32 %v443, %v422
    %v445 = vmul.f32 %v443, %v423
    %v446 = vadd.f32 %v402, %v444
    %v447 = vadd.f32 %v403, %v445
    %448 = vrot.lane.b32.xlu0 %v118, 1
    %v449 = vpop.permute.xlu0 %448
    %450 = vrot.lane.b32.xlu0 %v119, 1
    %v451 = vpop.permute.xlu0 %450
    %vm452 = vcmp.lt.s32.totalorder %v327, 1
    %v453 = vsel %vm452, %v449, %v451
    %v454 = vsel %vm452, %v451, %v449
    %v456 = vlaneseq
    %v457 = vshrl.u32 %v456, 7
    %v458 = vsub.s32 0, %v457
    %v459 = vrot.slane %v106, %v458
    %v460 = vlaneseq
    %v461 = vshrl.u32 %v460, 7
    %v462 = vsub.s32 1, %v461
    %v463 = vrot.slane %v106, %v462
    %v466 = vmul.f32 %v454, %v459
    %v467 = vmul.f32 %v453, %v463
    %s468 = sld [smem:[#allocation9 + $0x30]]
    %v469 = vstv %s468
    %v470 = vmul.f32 %v469, %v466
    %v471 = vmul.f32 %v469, %v467
    %v472 = vadd.f32 %v428, %v470
    %v473 = vadd.f32 %v429, %v471
    %s474 = sld [smem:[#allocation9 + $0x31]]
    %v475 = vstv %s474
    %v476 = vmul.f32 %v475, %v466
    %v477 = vmul.f32 %v475, %v467
    %v478 = vadd.f32 %v434, %v476
    %v479 = vadd.f32 %v435, %v477
    %s480 = sld [smem:[#allocation9 + $0x32]]
    %v481 = vstv %s480
    %v482 = vmul.f32 %v481, %v466
    %v483 = vmul.f32 %v481, %v467
    %v484 = vadd.f32 %v440, %v482
    %v485 = vadd.f32 %v441, %v483
    %s486 = sld [smem:[#allocation9 + $0x33]]
    %v487 = vstv %s486
    %v488 = vmul.f32 %v487, %v466
    %v489 = vmul.f32 %v487, %v467
    %v490 = vadd.f32 %v446, %v488
    %v491 = vadd.f32 %v447, %v489
    %s492 = sld [smem:[#allocation9 + $0x40]]
    %v493 = vstv %s492
    %v494 = vmul.f32 %v493, %v118
    %v495 = vmul.f32 %v493, %v119
    %v496 = vadd.f32 %v472, %v494
    %v497 = vadd.f32 %v473, %v495
    %s498 = sld [smem:[#allocation9 + $0x41]]
    %v499 = vstv %s498
    %v500 = vmul.f32 %v499, %v118
    %v501 = vmul.f32 %v499, %v119
    %v502 = vadd.f32 %v478, %v500
    %v503 = vadd.f32 %v479, %v501
    %s504 = sld [smem:[#allocation9 + $0x42]]
    %v505 = vstv %s504
    %v506 = vmul.f32 %v505, %v118
    %v507 = vmul.f32 %v505, %v119
    %v508 = vadd.f32 %v484, %v506
    %v509 = vadd.f32 %v485, %v507
    %s510 = sld [smem:[#allocation9 + $0x43]]
    %v511 = vstv %s510
    %v512 = vmul.f32 %v511, %v118
    %v513 = vmul.f32 %v511, %v119
    %v514 = vadd.f32 %v490, %v512
    %v515 = vadd.f32 %v491, %v513
    %516 = vrot.lane.b32.xlu0 %v118, 127
    %v517 = vpop.permute.xlu0 %516
    %518 = vrot.lane.b32.xlu0 %v119, 127
    %v519 = vpop.permute.xlu0 %518
    %vm520 = vcmp.lt.s32.totalorder %v327, 127
    %v521 = vsel %vm520, %v517, %v519
    %v522 = vsel %vm520, %v519, %v517
    %v524 = vlaneseq
    %v525 = vshrl.u32 %v524, 7
    %v526 = vsub.s32 0, %v525
    %v527 = vrot.slane %v108, %v526
    %v528 = vlaneseq
    %v529 = vshrl.u32 %v528, 7
    %v530 = vsub.s32 1, %v529
    %v531 = vrot.slane %v108, %v530
    %v534 = vmul.f32 %v521, %v527
    %v535 = vmul.f32 %v522, %v531
    %s536 = sld [smem:[#allocation9 + $0x50]]
    %v537 = vstv %s536
    %v538 = vmul.f32 %v537, %v534
    %v539 = vmul.f32 %v537, %v535
    %v540 = vadd.f32 %v496, %v538
    %v541 = vadd.f32 %v497, %v539
    %s542 = sld [smem:[#allocation9 + $0x51]]
    %v543 = vstv %s542
    %v544 = vmul.f32 %v543, %v534
    %v545 = vmul.f32 %v543, %v535
    %v546 = vadd.f32 %v502, %v544
    %v547 = vadd.f32 %v503, %v545
    %s548 = sld [smem:[#allocation9 + $0x52]]
    %v549 = vstv %s548
    %v550 = vmul.f32 %v549, %v534
    %v551 = vmul.f32 %v549, %v535
    %v552 = vadd.f32 %v508, %v550
    %v553 = vadd.f32 %v509, %v551
    %s554 = sld [smem:[#allocation9 + $0x53]]
    %v555 = vstv %s554
    %v556 = vmul.f32 %v555, %v534
    %v557 = vmul.f32 %v555, %v535
    %v558 = vadd.f32 %v514, %v556
    %v559 = vadd.f32 %v515, %v557
    %560 = vrot.lane.b32.xlu0 %v118, 113
    %v561 = vpop.permute.xlu0 %560
    %562 = vrot.lane.b32.xlu0 %v119, 113
    %v563 = vpop.permute.xlu0 %562
    %vm564 = vcmp.lt.s32.totalorder %v327, 113
    %v565 = vsel %vm564, %v561, %v563
    %v566 = vsel %vm564, %v563, %v561
    %v568 = vlaneseq
    %v569 = vshrl.u32 %v568, 7
    %v570 = vsub.s32 0, %v569
    %v571 = vrot.slane %v110, %v570
    %v572 = vlaneseq
    %v573 = vshrl.u32 %v572, 7
    %v574 = vsub.s32 1, %v573
    %v575 = vrot.slane %v110, %v574
    %v578 = vmul.f32 %v565, %v571
    %v579 = vmul.f32 %v566, %v575
    %s580 = sld [smem:[#allocation9 + $0x60]]
    %v581 = vstv %s580
    %v582 = vmul.f32 %v581, %v578
    %v583 = vmul.f32 %v581, %v579
    %v584 = vadd.f32 %v540, %v582
    %v585 = vadd.f32 %v541, %v583
    %s586 = sld [smem:[#allocation9 + $0x61]]
    %v587 = vstv %s586
    %v588 = vmul.f32 %v587, %v578
    %v589 = vmul.f32 %v587, %v579
    %v590 = vadd.f32 %v546, %v588
    %v591 = vadd.f32 %v547, %v589
    %s592 = sld [smem:[#allocation9 + $0x62]]
    %v593 = vstv %s592
    %v594 = vmul.f32 %v593, %v578
    %v595 = vmul.f32 %v593, %v579
    %v596 = vadd.f32 %v552, %v594
    %v597 = vadd.f32 %v553, %v595
    %s598 = sld [smem:[#allocation9 + $0x63]]
    %v599 = vstv %s598
    %v600 = vmul.f32 %v599, %v578
    %v601 = vmul.f32 %v599, %v579
    %v602 = vadd.f32 %v558, %v600
    %v603 = vadd.f32 %v559, %v601
    %604 = vrot.lane.b32.xlu0 %v118, 112
    %v605 = vpop.permute.xlu0 %604
    %606 = vrot.lane.b32.xlu0 %v119, 112
    %v607 = vpop.permute.xlu0 %606
    %vm608 = vcmp.lt.s32.totalorder %v327, 112
    %v609 = vsel %vm608, %v605, %v607
    %v610 = vsel %vm608, %v607, %v605
    %v612 = vlaneseq
    %v613 = vshrl.u32 %v612, 7
    %v614 = vsub.s32 0, %v613
    %v615 = vrot.slane %v112, %v614
    %v616 = vlaneseq
    %v617 = vshrl.u32 %v616, 7
    %v618 = vsub.s32 1, %v617
    %v619 = vrot.slane %v112, %v618
    %v622 = vmul.f32 %v609, %v615
    %v623 = vmul.f32 %v610, %v619
    %s624 = sld [smem:[#allocation9 + $0x70]]
    %v625 = vstv %s624
    %v626 = vmul.f32 %v625, %v622
    %v627 = vmul.f32 %v625, %v623
    %v628 = vadd.f32 %v584, %v626
    %v629 = vadd.f32 %v585, %v627
    %s630 = sld [smem:[#allocation9 + $0x71]]
    %v631 = vstv %s630
    %v632 = vmul.f32 %v631, %v622
    %v633 = vmul.f32 %v631, %v623
    %v634 = vadd.f32 %v590, %v632
    %v635 = vadd.f32 %v591, %v633
    %s636 = sld [smem:[#allocation9 + $0x72]]
    %v637 = vstv %s636
    %v638 = vmul.f32 %v637, %v622
    %v639 = vmul.f32 %v637, %v623
    %v640 = vadd.f32 %v596, %v638
    %v641 = vadd.f32 %v597, %v639
    %s642 = sld [smem:[#allocation9 + $0x73]]
    %v643 = vstv %s642
    %v644 = vmul.f32 %v643, %v622
    %v645 = vmul.f32 %v643, %v623
    %v646 = vadd.f32 %v602, %v644
    %v647 = vadd.f32 %v603, %v645
    %648 = vrot.lane.b32.xlu0 %v118, 111
    %v649 = vpop.permute.xlu0 %648
    %650 = vrot.lane.b32.xlu0 %v119, 111
    %v651 = vpop.permute.xlu0 %650
    %vm652 = vcmp.lt.s32.totalorder %v327, 111
    %v653 = vsel %vm652, %v649, %v651
    %v654 = vsel %vm652, %v651, %v649
    %v656 = vlaneseq
    %v657 = vshrl.u32 %v656, 7
    %v658 = vsub.s32 0, %v657
    %v659 = vrot.slane %v114, %v658
    %v660 = vlaneseq
    %v661 = vshrl.u32 %v660, 7
    %v662 = vsub.s32 1, %v661
    %v663 = vrot.slane %v114, %v662
    %v666 = vmul.f32 %v653, %v659
    %v667 = vmul.f32 %v654, %v663
    %s668 = sld [smem:[#allocation9 + $0x80]]
    %v669 = vstv %s668
    %v670 = vmul.f32 %v669, %v666
    %v671 = vmul.f32 %v669, %v667
    %v672 = vadd.f32 %v628, %v670
    %v673 = vadd.f32 %v629, %v671
    %s674 = sld [smem:[#allocation9 + $0x81]]
    %v675 = vstv %s674
    %v676 = vmul.f32 %v675, %v666
    %v677 = vmul.f32 %v675, %v667
    %v678 = vadd.f32 %v634, %v676
    %v679 = vadd.f32 %v635, %v677
    %s680 = sld [smem:[#allocation9 + $0x82]]
    %v681 = vstv %s680
    %v682 = vmul.f32 %v681, %v666
    %v683 = vmul.f32 %v681, %v667
    %v684 = vadd.f32 %v640, %v682
    %v685 = vadd.f32 %v641, %v683
    %s686 = sld [smem:[#allocation9 + $0x83]]
    %v687 = vstv %s686
    %v688 = vmul.f32 %v687, %v666
    %v689 = vmul.f32 %v687, %v667
    %v690 = vadd.f32 %v646, %v688
    %v691 = vadd.f32 %v647, %v689
    %v692 = vmul.f32 %v241, %v672
    %v693 = vmul.f32 %v241, %v673
    %v694 = vadd.f32 %v315, %v692
    %v695 = vadd.f32 %v315, %v693
    %v696 = vmul.f32 %v241, %v678
    %v697 = vmul.f32 %v241, %v679
    %v698 = vadd.f32 %v317, %v696
    %v699 = vadd.f32 %v317, %v697
    %v700 = vmul.f32 %v241, %v684
    %v701 = vmul.f32 %v241, %v685
    %v702 = vadd.f32 %v319, %v700
    %v703 = vadd.f32 %v319, %v701
    %v704 = vmul.f32 %v241, %v690
    %v705 = vmul.f32 %v241, %v691
    %v706 = vadd.f32 %v321, %v704
    %v707 = vadd.f32 %v321, %v705
    %708 = vrot.lane.b32.xlu0 %v120, 17
    %v709 = vpop.permute.xlu0 %708
    %710 = vrot.lane.b32.xlu0 %v121, 17
    %v711 = vpop.permute.xlu0 %710
    %v712 = vsel %vm328, %v709, %v711
    %v713 = vsel %vm328, %v711, %v709
    %v714 = vmul.f32 %v713, %v335
    %v715 = vmul.f32 %v712, %v339
    %s716 = sld [smem:[#allocation9 + $0x4]]
    %v717 = vstv %s716
    %v718 = vmul.f32 %v717, %v714
    %v719 = vmul.f32 %v717, %v715
    %s720 = sld [smem:[#allocation9 + $0x5]]
    %v721 = vstv %s720
    %v722 = vmul.f32 %v721, %v714
    %v723 = vmul.f32 %v721, %v715
    %s724 = sld [smem:[#allocation9 + $0x6]]
    %v725 = vstv %s724
    %v726 = vmul.f32 %v725, %v714
    %v727 = vmul.f32 %v725, %v715
    %s728 = sld [smem:[#allocation9 + $0x7]]
    %v729 = vstv %s728
    %v730 = vmul.f32 %v729, %v714
    %v731 = vmul.f32 %v729, %v715
    %732 = vrot.lane.b32.xlu0 %v120, 16
    %v733 = vpop.permute.xlu0 %732
    %734 = vrot.lane.b32.xlu0 %v121, 16
    %v735 = vpop.permute.xlu0 %734
    %v736 = vsel %vm364, %v733, %v735
    %v737 = vsel %vm364, %v735, %v733
    %v738 = vmul.f32 %v737, %v371
    %v739 = vmul.f32 %v736, %v375
    %s740 = sld [smem:[#allocation9 + $0x14]]
    %v741 = vstv %s740
    %v742 = vmul.f32 %v741, %v738
    %v743 = vmul.f32 %v741, %v739
    %v744 = vadd.f32 %v718, %v742
    %v745 = vadd.f32 %v719, %v743
    %s746 = sld [smem:[#allocation9 + $0x15]]
    %v747 = vstv %s746
    %v748 = vmul.f32 %v747, %v738
    %v749 = vmul.f32 %v747, %v739
    %v750 = vadd.f32 %v722, %v748
    %v751 = vadd.f32 %v723, %v749
    %s752 = sld [smem:[#allocation9 + $0x16]]
    %v753 = vstv %s752
    %v754 = vmul.f32 %v753, %v738
    %v755 = vmul.f32 %v753, %v739
    %v756 = vadd.f32 %v726, %v754
    %v757 = vadd.f32 %v727, %v755
    %s758 = sld [smem:[#allocation9 + $0x17]]
    %v759 = vstv %s758
    %v760 = vmul.f32 %v759, %v738
    %v761 = vmul.f32 %v759, %v739
    %v762 = vadd.f32 %v730, %v760
    %v763 = vadd.f32 %v731, %v761
    %764 = vrot.lane.b32.xlu0 %v120, 15
    %v765 = vpop.permute.xlu0 %764
    %766 = vrot.lane.b32.xlu0 %v121, 15
    %v767 = vpop.permute.xlu0 %766
    %v768 = vsel %vm408, %v765, %v767
    %v769 = vsel %vm408, %v767, %v765
    %v770 = vmul.f32 %v769, %v415
    %v771 = vmul.f32 %v768, %v419
    %s772 = sld [smem:[#allocation9 + $0x24]]
    %v773 = vstv %s772
    %v774 = vmul.f32 %v773, %v770
    %v775 = vmul.f32 %v773, %v771
    %v776 = vadd.f32 %v744, %v774
    %v777 = vadd.f32 %v745, %v775
    %s778 = sld [smem:[#allocation9 + $0x25]]
    %v779 = vstv %s778
    %v780 = vmul.f32 %v779, %v770
    %v781 = vmul.f32 %v779, %v771
    %v782 = vadd.f32 %v750, %v780
    %v783 = vadd.f32 %v751, %v781
    %s784 = sld [smem:[#allocation9 + $0x26]]
    %v785 = vstv %s784
    %v786 = vmul.f32 %v785, %v770
    %v787 = vmul.f32 %v785, %v771
    %v788 = vadd.f32 %v756, %v786
    %v789 = vadd.f32 %v757, %v787
    %s790 = sld [smem:[#allocation9 + $0x27]]
    %v791 = vstv %s790
    %v792 = vmul.f32 %v791, %v770
    %v793 = vmul.f32 %v791, %v771
    %v794 = vadd.f32 %v762, %v792
    %v795 = vadd.f32 %v763, %v793
    %796 = vrot.lane.b32.xlu0 %v120, 1
    %v797 = vpop.permute.xlu0 %796
    %798 = vrot.lane.b32.xlu0 %v121, 1
    %v799 = vpop.permute.xlu0 %798
    %v800 = vsel %vm452, %v797, %v799
    %v801 = vsel %vm452, %v799, %v797
    %v802 = vmul.f32 %v801, %v459
    %v803 = vmul.f32 %v800, %v463
    %s804 = sld [smem:[#allocation9 + $0x34]]
    %v805 = vstv %s804
    %v806 = vmul.f32 %v805, %v802
    %v807 = vmul.f32 %v805, %v803
    %v808 = vadd.f32 %v776, %v806
    %v809 = vadd.f32 %v777, %v807
    %s810 = sld [smem:[#allocation9 + $0x35]]
    %v811 = vstv %s810
    %v812 = vmul.f32 %v811, %v802
    %v813 = vmul.f32 %v811, %v803
    %v814 = vadd.f32 %v782, %v812
    %v815 = vadd.f32 %v783, %v813
    %s816 = sld [smem:[#allocation9 + $0x36]]
    %v817 = vstv %s816
    %v818 = vmul.f32 %v817, %v802
    %v819 = vmul.f32 %v817, %v803
    %v820 = vadd.f32 %v788, %v818
    %v821 = vadd.f32 %v789, %v819
    %s822 = sld [smem:[#allocation9 + $0x37]]
    %v823 = vstv %s822
    %v824 = vmul.f32 %v823, %v802
    %v825 = vmul.f32 %v823, %v803
    %v826 = vadd.f32 %v794, %v824
    %v827 = vadd.f32 %v795, %v825
    %s828 = sld [smem:[#allocation9 + $0x44]]
    %v829 = vstv %s828
    %v830 = vmul.f32 %v829, %v120
    %v831 = vmul.f32 %v829, %v121
    %v832 = vadd.f32 %v808, %v830
    %v833 = vadd.f32 %v809, %v831
    %s834 = sld [smem:[#allocation9 + $0x45]]
    %v835 = vstv %s834
    %v836 = vmul.f32 %v835, %v120
    %v837 = vmul.f32 %v835, %v121
    %v838 = vadd.f32 %v814, %v836
    %v839 = vadd.f32 %v815, %v837
    %s840 = sld [smem:[#allocation9 + $0x46]]
    %v841 = vstv %s840
    %v842 = vmul.f32 %v841, %v120
    %v843 = vmul.f32 %v841, %v121
    %v844 = vadd.f32 %v820, %v842
    %v845 = vadd.f32 %v821, %v843
    %s846 = sld [smem:[#allocation9 + $0x47]]
    %v847 = vstv %s846
    %v848 = vmul.f32 %v847, %v120
    %v849 = vmul.f32 %v847, %v121
    %v850 = vadd.f32 %v826, %v848
    %v851 = vadd.f32 %v827, %v849
    %852 = vrot.lane.b32.xlu0 %v120, 127
    %v853 = vpop.permute.xlu0 %852
    %854 = vrot.lane.b32.xlu0 %v121, 127
    %v855 = vpop.permute.xlu0 %854
    %v856 = vsel %vm520, %v853, %v855
    %v857 = vsel %vm520, %v855, %v853
    %v858 = vmul.f32 %v856, %v527
    %v859 = vmul.f32 %v857, %v531
    %s860 = sld [smem:[#allocation9 + $0x54]]
    %v861 = vstv %s860
    %v862 = vmul.f32 %v861, %v858
    %v863 = vmul.f32 %v861, %v859
    %v864 = vadd.f32 %v832, %v862
    %v865 = vadd.f32 %v833, %v863
    %s866 = sld [smem:[#allocation9 + $0x55]]
    %v867 = vstv %s866
    %v868 = vmul.f32 %v867, %v858
    %v869 = vmul.f32 %v867, %v859
    %v870 = vadd.f32 %v838, %v868
    %v871 = vadd.f32 %v839, %v869
    %s872 = sld [smem:[#allocation9 + $0x56]]
    %v873 = vstv %s872
    %v874 = vmul.f32 %v873, %v858
    %v875 = vmul.f32 %v873, %v859
    %v876 = vadd.f32 %v844, %v874
    %v877 = vadd.f32 %v845, %v875
    %s878 = sld [smem:[#allocation9 + $0x57]]
    %v879 = vstv %s878
    %v880 = vmul.f32 %v879, %v858
    %v881 = vmul.f32 %v879, %v859
    %v882 = vadd.f32 %v850, %v880
    %v883 = vadd.f32 %v851, %v881
    %884 = vrot.lane.b32.xlu0 %v120, 113
    %v885 = vpop.permute.xlu0 %884
    %886 = vrot.lane.b32.xlu0 %v121, 113
    %v887 = vpop.permute.xlu0 %886
    %v888 = vsel %vm564, %v885, %v887
    %v889 = vsel %vm564, %v887, %v885
    %v890 = vmul.f32 %v888, %v571
    %v891 = vmul.f32 %v889, %v575
    %s892 = sld [smem:[#allocation9 + $0x64]]
    %v893 = vstv %s892
    %v894 = vmul.f32 %v893, %v890
    %v895 = vmul.f32 %v893, %v891
    %v896 = vadd.f32 %v864, %v894
    %v897 = vadd.f32 %v865, %v895
    %s898 = sld [smem:[#allocation9 + $0x65]]
    %v899 = vstv %s898
    %v900 = vmul.f32 %v899, %v890
    %v901 = vmul.f32 %v899, %v891
    %v902 = vadd.f32 %v870, %v900
    %v903 = vadd.f32 %v871, %v901
    %s904 = sld [smem:[#allocation9 + $0x66]]
    %v905 = vstv %s904
    %v906 = vmul.f32 %v905, %v890
    %v907 = vmul.f32 %v905, %v891
    %v908 = vadd.f32 %v876, %v906
    %v909 = vadd.f32 %v877, %v907
    %s910 = sld [smem:[#allocation9 + $0x67]]
    %v911 = vstv %s910
    %v912 = vmul.f32 %v911, %v890
    %v913 = vmul.f32 %v911, %v891
    %v914 = vadd.f32 %v882, %v912
    %v915 = vadd.f32 %v883, %v913
    %916 = vrot.lane.b32.xlu0 %v120, 112
    %v917 = vpop.permute.xlu0 %916
    %918 = vrot.lane.b32.xlu0 %v121, 112
    %v919 = vpop.permute.xlu0 %918
    %v920 = vsel %vm608, %v917, %v919
    %v921 = vsel %vm608, %v919, %v917
    %v922 = vmul.f32 %v920, %v615
    %v923 = vmul.f32 %v921, %v619
    %s924 = sld [smem:[#allocation9 + $0x74]]
    %v925 = vstv %s924
    %v926 = vmul.f32 %v925, %v922
    %v927 = vmul.f32 %v925, %v923
    %v928 = vadd.f32 %v896, %v926
    %v929 = vadd.f32 %v897, %v927
    %s930 = sld [smem:[#allocation9 + $0x75]]
    %v931 = vstv %s930
    %v932 = vmul.f32 %v931, %v922
    %v933 = vmul.f32 %v931, %v923
    %v934 = vadd.f32 %v902, %v932
    %v935 = vadd.f32 %v903, %v933
    %s936 = sld [smem:[#allocation9 + $0x76]]
    %v937 = vstv %s936
    %v938 = vmul.f32 %v937, %v922
    %v939 = vmul.f32 %v937, %v923
    %v940 = vadd.f32 %v908, %v938
    %v941 = vadd.f32 %v909, %v939
    %s942 = sld [smem:[#allocation9 + $0x77]]
    %v943 = vstv %s942
    %v944 = vmul.f32 %v943, %v922
    %v945 = vmul.f32 %v943, %v923
    %v946 = vadd.f32 %v914, %v944
    %v947 = vadd.f32 %v915, %v945
    %948 = vrot.lane.b32.xlu0 %v120, 111
    %v949 = vpop.permute.xlu0 %948
    %950 = vrot.lane.b32.xlu0 %v121, 111
    %v951 = vpop.permute.xlu0 %950
    %v952 = vsel %vm652, %v949, %v951
    %v953 = vsel %vm652, %v951, %v949
    %v954 = vmul.f32 %v952, %v659
    %v955 = vmul.f32 %v953, %v663
    %s956 = sld [smem:[#allocation9 + $0x84]]
    %v957 = vstv %s956
    %v958 = vmul.f32 %v957, %v954
    %v959 = vmul.f32 %v957, %v955
    %v960 = vadd.f32 %v928, %v958
    %v961 = vadd.f32 %v929, %v959
    %s962 = sld [smem:[#allocation9 + $0x85]]
    %v963 = vstv %s962
    %v964 = vmul.f32 %v963, %v954
    %v965 = vmul.f32 %v963, %v955
    %v966 = vadd.f32 %v934, %v964
    %v967 = vadd.f32 %v935, %v965
    %s968 = sld [smem:[#allocation9 + $0x86]]
    %v969 = vstv %s968
    %v970 = vmul.f32 %v969, %v954
    %v971 = vmul.f32 %v969, %v955
    %v972 = vadd.f32 %v940, %v970
    %v973 = vadd.f32 %v941, %v971
    %s974 = sld [smem:[#allocation9 + $0x87]]
    %v975 = vstv %s974
    %v976 = vmul.f32 %v975, %v954
    %v977 = vmul.f32 %v975, %v955
    %v978 = vadd.f32 %v946, %v976
    %v979 = vadd.f32 %v947, %v977
    %v980 = vmul.f32 %v265, %v960
    %v981 = vmul.f32 %v265, %v961
    %v982 = vadd.f32 %v694, %v980
    %v983 = vadd.f32 %v695, %v981
    %v984 = vmul.f32 %v265, %v966
    %v985 = vmul.f32 %v265, %v967
    %v986 = vadd.f32 %v698, %v984
    %v987 = vadd.f32 %v699, %v985
    %v988 = vmul.f32 %v265, %v972
    %v989 = vmul.f32 %v265, %v973
    %v990 = vadd.f32 %v702, %v988
    %v991 = vadd.f32 %v703, %v989
    %v992 = vmul.f32 %v265, %v978
    %v993 = vmul.f32 %v265, %v979
    %v994 = vadd.f32 %v706, %v992
    %v995 = vadd.f32 %v707, %v993
    %996 = vrot.lane.b32.xlu0 %v122, 17
    %v997 = vpop.permute.xlu0 %996
    %998 = vrot.lane.b32.xlu0 %v123, 17
    %v999 = vpop.permute.xlu0 %998
    %v1000 = vsel %vm328, %v997, %v999
    %v1001 = vsel %vm328, %v999, %v997
    %v1002 = vmul.f32 %v1001, %v335
    %v1003 = vmul.f32 %v1000, %v339
    %s1004 = sld [smem:[#allocation9 + $0x8]]
    %v1005 = vstv %s1004
    %v1006 = vmul.f32 %v1005, %v1002
    %v1007 = vmul.f32 %v1005, %v1003
    %s1008 = sld [smem:[#allocation9 + $0x9]]
    %v1009 = vstv %s1008
    %v1010 = vmul.f32 %v1009, %v1002
    %v1011 = vmul.f32 %v1009, %v1003
    %s1012 = sld [smem:[#allocation9 + $0xa]]
    %v1013 = vstv %s1012
    %v1014 = vmul.f32 %v1013, %v1002
    %v1015 = vmul.f32 %v1013, %v1003
    %s1016 = sld [smem:[#allocation9 + $0xb]]
    %v1017 = vstv %s1016
    %v1018 = vmul.f32 %v1017, %v1002
    %v1019 = vmul.f32 %v1017, %v1003
    %1020 = vrot.lane.b32.xlu0 %v122, 16
    %v1021 = vpop.permute.xlu0 %1020
    %1022 = vrot.lane.b32.xlu0 %v123, 16
    %v1023 = vpop.permute.xlu0 %1022
    %v1024 = vsel %vm364, %v1021, %v1023
    %v1025 = vsel %vm364, %v1023, %v1021
    %v1026 = vmul.f32 %v1025, %v371
    %v1027 = vmul.f32 %v1024, %v375
    %s1028 = sld [smem:[#allocation9 + $0x18]]
    %v1029 = vstv %s1028
    %v1030 = vmul.f32 %v1029, %v1026
    %v1031 = vmul.f32 %v1029, %v1027
    %v1032 = vadd.f32 %v1006, %v1030
    %v1033 = vadd.f32 %v1007, %v1031
    %s1034 = sld [smem:[#allocation9 + $0x19]]
    %v1035 = vstv %s1034
    %v1036 = vmul.f32 %v1035, %v1026
    %v1037 = vmul.f32 %v1035, %v1027
    %v1038 = vadd.f32 %v1010, %v1036
    %v1039 = vadd.f32 %v1011, %v1037
    %s1040 = sld [smem:[#allocation9 + $0x1a]]
    %v1041 = vstv %s1040
    %v1042 = vmul.f32 %v1041, %v1026
    %v1043 = vmul.f32 %v1041, %v1027
    %v1044 = vadd.f32 %v1014, %v1042
    %v1045 = vadd.f32 %v1015, %v1043
    %s1046 = sld [smem:[#allocation9 + $0x1b]]
    %v1047 = vstv %s1046
    %v1048 = vmul.f32 %v1047, %v1026
    %v1049 = vmul.f32 %v1047, %v1027
    %v1050 = vadd.f32 %v1018, %v1048
    %v1051 = vadd.f32 %v1019, %v1049
    %1052 = vrot.lane.b32.xlu0 %v122, 15
    %v1053 = vpop.permute.xlu0 %1052
    %1054 = vrot.lane.b32.xlu0 %v123, 15
    %v1055 = vpop.permute.xlu0 %1054
    %v1056 = vsel %vm408, %v1053, %v1055
    %v1057 = vsel %vm408, %v1055, %v1053
    %v1058 = vmul.f32 %v1057, %v415
    %v1059 = vmul.f32 %v1056, %v419
    %s1060 = sld [smem:[#allocation9 + $0x28]]
    %v1061 = vstv %s1060
    %v1062 = vmul.f32 %v1061, %v1058
    %v1063 = vmul.f32 %v1061, %v1059
    %v1064 = vadd.f32 %v1032, %v1062
    %v1065 = vadd.f32 %v1033, %v1063
    %s1066 = sld [smem:[#allocation9 + $0x29]]
    %v1067 = vstv %s1066
    %v1068 = vmul.f32 %v1067, %v1058
    %v1069 = vmul.f32 %v1067, %v1059
    %v1070 = vadd.f32 %v1038, %v1068
    %v1071 = vadd.f32 %v1039, %v1069
    %s1072 = sld [smem:[#allocation9 + $0x2a]]
    %v1073 = vstv %s1072
    %v1074 = vmul.f32 %v1073, %v1058
    %v1075 = vmul.f32 %v1073, %v1059
    %v1076 = vadd.f32 %v1044, %v1074
    %v1077 = vadd.f32 %v1045, %v1075
    %s1078 = sld [smem:[#allocation9 + $0x2b]]
    %v1079 = vstv %s1078
    %v1080 = vmul.f32 %v1079, %v1058
    %v1081 = vmul.f32 %v1079, %v1059
    %v1082 = vadd.f32 %v1050, %v1080
    %v1083 = vadd.f32 %v1051, %v1081
    %1084 = vrot.lane.b32.xlu0 %v122, 1
    %v1085 = vpop.permute.xlu0 %1084
    %1086 = vrot.lane.b32.xlu0 %v123, 1
    %v1087 = vpop.permute.xlu0 %1086
    %v1088 = vsel %vm452, %v1085, %v1087
    %v1089 = vsel %vm452, %v1087, %v1085
    %v1090 = vmul.f32 %v1089, %v459
    %v1091 = vmul.f32 %v1088, %v463
    %s1092 = sld [smem:[#allocation9 + $0x38]]
    %v1093 = vstv %s1092
    %v1094 = vmul.f32 %v1093, %v1090
    %v1095 = vmul.f32 %v1093, %v1091
    %v1096 = vadd.f32 %v1064, %v1094
    %v1097 = vadd.f32 %v1065, %v1095
    %s1098 = sld [smem:[#allocation9 + $0x39]]
    %v1099 = vstv %s1098
    %v1100 = vmul.f32 %v1099, %v1090
    %v1101 = vmul.f32 %v1099, %v1091
    %v1102 = vadd.f32 %v1070, %v1100
    %v1103 = vadd.f32 %v1071, %v1101
    %s1104 = sld [smem:[#allocation9 + $0x3a]]
    %v1105 = vstv %s1104
    %v1106 = vmul.f32 %v1105, %v1090
    %v1107 = vmul.f32 %v1105, %v1091
    %v1108 = vadd.f32 %v1076, %v1106
    %v1109 = vadd.f32 %v1077, %v1107
    %s1110 = sld [smem:[#allocation9 + $0x3b]]
    %v1111 = vstv %s1110
    %v1112 = vmul.f32 %v1111, %v1090
    %v1113 = vmul.f32 %v1111, %v1091
    %v1114 = vadd.f32 %v1082, %v1112
    %v1115 = vadd.f32 %v1083, %v1113
    %s1116 = sld [smem:[#allocation9 + $0x48]]
    %v1117 = vstv %s1116
    %v1118 = vmul.f32 %v1117, %v122
    %v1119 = vmul.f32 %v1117, %v123
    %v1120 = vadd.f32 %v1096, %v1118
    %v1121 = vadd.f32 %v1097, %v1119
    %s1122 = sld [smem:[#allocation9 + $0x49]]
    %v1123 = vstv %s1122
    %v1124 = vmul.f32 %v1123, %v122
    %v1125 = vmul.f32 %v1123, %v123
    %v1126 = vadd.f32 %v1102, %v1124
    %v1127 = vadd.f32 %v1103, %v1125
    %s1128 = sld [smem:[#allocation9 + $0x4a]]
    %v1129 = vstv %s1128
    %v1130 = vmul.f32 %v1129, %v122
    %v1131 = vmul.f32 %v1129, %v123
    %v1132 = vadd.f32 %v1108, %v1130
    %v1133 = vadd.f32 %v1109, %v1131
    %s1134 = sld [smem:[#allocation9 + $0x4b]]
    %v1135 = vstv %s1134
    %v1136 = vmul.f32 %v1135, %v122
    %v1137 = vmul.f32 %v1135, %v123
    %v1138 = vadd.f32 %v1114, %v1136
    %v1139 = vadd.f32 %v1115, %v1137
    %1140 = vrot.lane.b32.xlu0 %v122, 127
    %v1141 = vpop.permute.xlu0 %1140
    %1142 = vrot.lane.b32.xlu0 %v123, 127
    %v1143 = vpop.permute.xlu0 %1142
    %v1144 = vsel %vm520, %v1141, %v1143
    %v1145 = vsel %vm520, %v1143, %v1141
    %v1146 = vmul.f32 %v1144, %v527
    %v1147 = vmul.f32 %v1145, %v531
    %s1148 = sld [smem:[#allocation9 + $0x58]]
    %v1149 = vstv %s1148
    %v1150 = vmul.f32 %v1149, %v1146
    %v1151 = vmul.f32 %v1149, %v1147
    %v1152 = vadd.f32 %v1120, %v1150
    %v1153 = vadd.f32 %v1121, %v1151
    %s1154 = sld [smem:[#allocation9 + $0x59]]
    %v1155 = vstv %s1154
    %v1156 = vmul.f32 %v1155, %v1146
    %v1157 = vmul.f32 %v1155, %v1147
    %v1158 = vadd.f32 %v1126, %v1156
    %v1159 = vadd.f32 %v1127, %v1157
    %s1160 = sld [smem:[#allocation9 + $0x5a]]
    %v1161 = vstv %s1160
    %v1162 = vmul.f32 %v1161, %v1146
    %v1163 = vmul.f32 %v1161, %v1147
    %v1164 = vadd.f32 %v1132, %v1162
    %v1165 = vadd.f32 %v1133, %v1163
    %s1166 = sld [smem:[#allocation9 + $0x5b]]
    %v1167 = vstv %s1166
    %v1168 = vmul.f32 %v1167, %v1146
    %v1169 = vmul.f32 %v1167, %v1147
    %v1170 = vadd.f32 %v1138, %v1168
    %v1171 = vadd.f32 %v1139, %v1169
    %1172 = vrot.lane.b32.xlu0 %v122, 113
    %v1173 = vpop.permute.xlu0 %1172
    %1174 = vrot.lane.b32.xlu0 %v123, 113
    %v1175 = vpop.permute.xlu0 %1174
    %v1176 = vsel %vm564, %v1173, %v1175
    %v1177 = vsel %vm564, %v1175, %v1173
    %v1178 = vmul.f32 %v1176, %v571
    %v1179 = vmul.f32 %v1177, %v575
    %s1180 = sld [smem:[#allocation9 + $0x68]]
    %v1181 = vstv %s1180
    %v1182 = vmul.f32 %v1181, %v1178
    %v1183 = vmul.f32 %v1181, %v1179
    %v1184 = vadd.f32 %v1152, %v1182
    %v1185 = vadd.f32 %v1153, %v1183
    %s1186 = sld [smem:[#allocation9 + $0x69]]
    %v1187 = vstv %s1186
    %v1188 = vmul.f32 %v1187, %v1178
    %v1189 = vmul.f32 %v1187, %v1179
    %v1190 = vadd.f32 %v1158, %v1188
    %v1191 = vadd.f32 %v1159, %v1189
    %s1192 = sld [smem:[#allocation9 + $0x6a]]
    %v1193 = vstv %s1192
    %v1194 = vmul.f32 %v1193, %v1178
    %v1195 = vmul.f32 %v1193, %v1179
    %v1196 = vadd.f32 %v1164, %v1194
    %v1197 = vadd.f32 %v1165, %v1195
    %s1198 = sld [smem:[#allocation9 + $0x6b]]
    %v1199 = vstv %s1198
    %v1200 = vmul.f32 %v1199, %v1178
    %v1201 = vmul.f32 %v1199, %v1179
    %v1202 = vadd.f32 %v1170, %v1200
    %v1203 = vadd.f32 %v1171, %v1201
    %1204 = vrot.lane.b32.xlu0 %v122, 112
    %v1205 = vpop.permute.xlu0 %1204
    %1206 = vrot.lane.b32.xlu0 %v123, 112
    %v1207 = vpop.permute.xlu0 %1206
    %v1208 = vsel %vm608, %v1205, %v1207
    %v1209 = vsel %vm608, %v1207, %v1205
    %v1210 = vmul.f32 %v1208, %v615
    %v1211 = vmul.f32 %v1209, %v619
    %s1212 = sld [smem:[#allocation9 + $0x78]]
    %v1213 = vstv %s1212
    %v1214 = vmul.f32 %v1213, %v1210
    %v1215 = vmul.f32 %v1213, %v1211
    %v1216 = vadd.f32 %v1184, %v1214
    %v1217 = vadd.f32 %v1185, %v1215
    %s1218 = sld [smem:[#allocation9 + $0x79]]
    %v1219 = vstv %s1218
    %v1220 = vmul.f32 %v1219, %v1210
    %v1221 = vmul.f32 %v1219, %v1211
    %v1222 = vadd.f32 %v1190, %v1220
    %v1223 = vadd.f32 %v1191, %v1221
    %s1224 = sld [smem:[#allocation9 + $0x7a]]
    %v1225 = vstv %s1224
    %v1226 = vmul.f32 %v1225, %v1210
    %v1227 = vmul.f32 %v1225, %v1211
    %v1228 = vadd.f32 %v1196, %v1226
    %v1229 = vadd.f32 %v1197, %v1227
    %s1230 = sld [smem:[#allocation9 + $0x7b]]
    %v1231 = vstv %s1230
    %v1232 = vmul.f32 %v1231, %v1210
    %v1233 = vmul.f32 %v1231, %v1211
    %v1234 = vadd.f32 %v1202, %v1232
    %v1235 = vadd.f32 %v1203, %v1233
    %1236 = vrot.lane.b32.xlu0 %v122, 111
    %v1237 = vpop.permute.xlu0 %1236
    %1238 = vrot.lane.b32.xlu0 %v123, 111
    %v1239 = vpop.permute.xlu0 %1238
    %v1240 = vsel %vm652, %v1237, %v1239
    %v1241 = vsel %vm652, %v1239, %v1237
    %v1242 = vmul.f32 %v1240, %v659
    %v1243 = vmul.f32 %v1241, %v663
    %s1244 = sld [smem:[#allocation9 + $0x88]]
    %v1245 = vstv %s1244
    %v1246 = vmul.f32 %v1245, %v1242
    %v1247 = vmul.f32 %v1245, %v1243
    %v1248 = vadd.f32 %v1216, %v1246
    %v1249 = vadd.f32 %v1217, %v1247
    %s1250 = sld [smem:[#allocation9 + $0x89]]
    %v1251 = vstv %s1250
    %v1252 = vmul.f32 %v1251, %v1242
    %v1253 = vmul.f32 %v1251, %v1243
    %v1254 = vadd.f32 %v1222, %v1252
    %v1255 = vadd.f32 %v1223, %v1253
    %s1256 = sld [smem:[#allocation9 + $0x8a]]
    %v1257 = vstv %s1256
    %v1258 = vmul.f32 %v1257, %v1242
    %v1259 = vmul.f32 %v1257, %v1243
    %v1260 = vadd.f32 %v1228, %v1258
    %v1261 = vadd.f32 %v1229, %v1259
    %s1262 = sld [smem:[#allocation9 + $0x8b]]
    %v1263 = vstv %s1262
    %v1264 = vmul.f32 %v1263, %v1242
    %v1265 = vmul.f32 %v1263, %v1243
    %v1266 = vadd.f32 %v1234, %v1264
    %v1267 = vadd.f32 %v1235, %v1265
    %v1268 = vmul.f32 %v289, %v1248
    %v1269 = vmul.f32 %v289, %v1249
    %v1270 = vadd.f32 %v982, %v1268
    %v1271 = vadd.f32 %v983, %v1269
    %v1272 = vmul.f32 %v289, %v1254
    %v1273 = vmul.f32 %v289, %v1255
    %v1274 = vadd.f32 %v986, %v1272
    %v1275 = vadd.f32 %v987, %v1273
    %v1276 = vmul.f32 %v289, %v1260
    %v1277 = vmul.f32 %v289, %v1261
    %v1278 = vadd.f32 %v990, %v1276
    %v1279 = vadd.f32 %v991, %v1277
    %v1280 = vmul.f32 %v289, %v1266
    %v1281 = vmul.f32 %v289, %v1267
    %v1282 = vadd.f32 %v994, %v1280
    %v1283 = vadd.f32 %v995, %v1281
    %1284 = vrot.lane.b32.xlu0 %v124, 17
    %v1285 = vpop.permute.xlu0 %1284
    %1286 = vrot.lane.b32.xlu0 %v125, 17
    %v1287 = vpop.permute.xlu0 %1286
    %v1288 = vsel %vm328, %v1285, %v1287
    %v1289 = vsel %vm328, %v1287, %v1285
    %v1290 = vmul.f32 %v1289, %v335
    %v1291 = vmul.f32 %v1288, %v339
    %s1292 = sld [smem:[#allocation9 + $0xc]]
    %v1293 = vstv %s1292
    %v1294 = vmul.f32 %v1293, %v1290
    %v1295 = vmul.f32 %v1293, %v1291
    %s1296 = sld [smem:[#allocation9 + $0xd]]
    %v1297 = vstv %s1296
    %v1298 = vmul.f32 %v1297, %v1290
    %v1299 = vmul.f32 %v1297, %v1291
    %s1300 = sld [smem:[#allocation9 + $0xe]]
    %v1301 = vstv %s1300
    %v1302 = vmul.f32 %v1301, %v1290
    %v1303 = vmul.f32 %v1301, %v1291
    %s1304 = sld [smem:[#allocation9 + $0xf]]
    %v1305 = vstv %s1304
    %v1306 = vmul.f32 %v1305, %v1290
    %v1307 = vmul.f32 %v1305, %v1291
    %1308 = vrot.lane.b32.xlu0 %v124, 16
    %v1309 = vpop.permute.xlu0 %1308
    %1310 = vrot.lane.b32.xlu0 %v125, 16
    %v1311 = vpop.permute.xlu0 %1310
    %v1312 = vsel %vm364, %v1309, %v1311
    %v1313 = vsel %vm364, %v1311, %v1309
    %v1314 = vmul.f32 %v1313, %v371
    %v1315 = vmul.f32 %v1312, %v375
    %s1316 = sld [smem:[#allocation9 + $0x1c]]
    %v1317 = vstv %s1316
    %v1318 = vmul.f32 %v1317, %v1314
    %v1319 = vmul.f32 %v1317, %v1315
    %v1320 = vadd.f32 %v1294, %v1318
    %v1321 = vadd.f32 %v1295, %v1319
    %s1322 = sld [smem:[#allocation9 + $0x1d]]
    %v1323 = vstv %s1322
    %v1324 = vmul.f32 %v1323, %v1314
    %v1325 = vmul.f32 %v1323, %v1315
    %v1326 = vadd.f32 %v1298, %v1324
    %v1327 = vadd.f32 %v1299, %v1325
    %s1328 = sld [smem:[#allocation9 + $0x1e]]
    %v1329 = vstv %s1328
    %v1330 = vmul.f32 %v1329, %v1314
    %v1331 = vmul.f32 %v1329, %v1315
    %v1332 = vadd.f32 %v1302, %v1330
    %v1333 = vadd.f32 %v1303, %v1331
    %s1334 = sld [smem:[#allocation9 + $0x1f]]
    %v1335 = vstv %s1334
    %v1336 = vmul.f32 %v1335, %v1314
    %v1337 = vmul.f32 %v1335, %v1315
    %v1338 = vadd.f32 %v1306, %v1336
    %v1339 = vadd.f32 %v1307, %v1337
    %1340 = vrot.lane.b32.xlu0 %v124, 15
    %v1341 = vpop.permute.xlu0 %1340
    %1342 = vrot.lane.b32.xlu0 %v125, 15
    %v1343 = vpop.permute.xlu0 %1342
    %v1344 = vsel %vm408, %v1341, %v1343
    %v1345 = vsel %vm408, %v1343, %v1341
    %v1346 = vmul.f32 %v1345, %v415
    %v1347 = vmul.f32 %v1344, %v419
    %s1348 = sld [smem:[#allocation9 + $0x2c]]
    %v1349 = vstv %s1348
    %v1350 = vmul.f32 %v1349, %v1346
    %v1351 = vmul.f32 %v1349, %v1347
    %v1352 = vadd.f32 %v1320, %v1350
    %v1353 = vadd.f32 %v1321, %v1351
    %s1354 = sld [smem:[#allocation9 + $0x2d]]
    %v1355 = vstv %s1354
    %v1356 = vmul.f32 %v1355, %v1346
    %v1357 = vmul.f32 %v1355, %v1347
    %v1358 = vadd.f32 %v1326, %v1356
    %v1359 = vadd.f32 %v1327, %v1357
    %s1360 = sld [smem:[#allocation9 + $0x2e]]
    %v1361 = vstv %s1360
    %v1362 = vmul.f32 %v1361, %v1346
    %v1363 = vmul.f32 %v1361, %v1347
    %v1364 = vadd.f32 %v1332, %v1362
    %v1365 = vadd.f32 %v1333, %v1363
    %s1366 = sld [smem:[#allocation9 + $0x2f]]
    %v1367 = vstv %s1366
    %v1368 = vmul.f32 %v1367, %v1346
    %v1369 = vmul.f32 %v1367, %v1347
    %v1370 = vadd.f32 %v1338, %v1368
    %v1371 = vadd.f32 %v1339, %v1369
    %1372 = vrot.lane.b32.xlu0 %v124, 1
    %v1373 = vpop.permute.xlu0 %1372
    %1374 = vrot.lane.b32.xlu0 %v125, 1
    %v1375 = vpop.permute.xlu0 %1374
    %v1376 = vsel %vm452, %v1373, %v1375
    %v1377 = vsel %vm452, %v1375, %v1373
    %v1378 = vmul.f32 %v1377, %v459
    %v1379 = vmul.f32 %v1376, %v463
    %s1380 = sld [smem:[#allocation9 + $0x3c]]
    %v1381 = vstv %s1380
    %v1382 = vmul.f32 %v1381, %v1378
    %v1383 = vmul.f32 %v1381, %v1379
    %v1384 = vadd.f32 %v1352, %v1382
    %v1385 = vadd.f32 %v1353, %v1383
    %s1386 = sld [smem:[#allocation9 + $0x3d]]
    %v1387 = vstv %s1386
    %v1388 = vmul.f32 %v1387, %v1378
    %v1389 = vmul.f32 %v1387, %v1379
    %v1390 = vadd.f32 %v1358, %v1388
    %v1391 = vadd.f32 %v1359, %v1389
    %s1392 = sld [smem:[#allocation9 + $0x3e]]
    %v1393 = vstv %s1392
    %v1394 = vmul.f32 %v1393, %v1378
    %v1395 = vmul.f32 %v1393, %v1379
    %v1396 = vadd.f32 %v1364, %v1394
    %v1397 = vadd.f32 %v1365, %v1395
    %s1398 = sld [smem:[#allocation9 + $0x3f]]
    %v1399 = vstv %s1398
    %v1400 = vmul.f32 %v1399, %v1378
    %v1401 = vmul.f32 %v1399, %v1379
    %v1402 = vadd.f32 %v1370, %v1400
    %v1403 = vadd.f32 %v1371, %v1401
    %s1404 = sld [smem:[#allocation9 + $0x4c]]
    %v1405 = vstv %s1404
    %v1406 = vmul.f32 %v1405, %v124
    %v1407 = vmul.f32 %v1405, %v125
    %v1408 = vadd.f32 %v1384, %v1406
    %v1409 = vadd.f32 %v1385, %v1407
    %s1410 = sld [smem:[#allocation9 + $0x4d]]
    %v1411 = vstv %s1410
    %v1412 = vmul.f32 %v1411, %v124
    %v1413 = vmul.f32 %v1411, %v125
    %v1414 = vadd.f32 %v1390, %v1412
    %v1415 = vadd.f32 %v1391, %v1413
    %s1416 = sld [smem:[#allocation9 + $0x4e]]
    %v1417 = vstv %s1416
    %v1418 = vmul.f32 %v1417, %v124
    %v1419 = vmul.f32 %v1417, %v125
    %v1420 = vadd.f32 %v1396, %v1418
    %v1421 = vadd.f32 %v1397, %v1419
    %s1422 = sld [smem:[#allocation9 + $0x4f]]
    %v1423 = vstv %s1422
    %v1424 = vmul.f32 %v1423, %v124
    %v1425 = vmul.f32 %v1423, %v125
    %v1426 = vadd.f32 %v1402, %v1424
    %v1427 = vadd.f32 %v1403, %v1425
    %1428 = vrot.lane.b32.xlu0 %v124, 127
    %v1429 = vpop.permute.xlu0 %1428
    %1430 = vrot.lane.b32.xlu0 %v125, 127
    %v1431 = vpop.permute.xlu0 %1430
    %v1432 = vsel %vm520, %v1429, %v1431
    %v1433 = vsel %vm520, %v1431, %v1429
    %v1434 = vmul.f32 %v1432, %v527
    %v1435 = vmul.f32 %v1433, %v531
    %s1436 = sld [smem:[#allocation9 + $0x5c]]
    %v1437 = vstv %s1436
    %v1438 = vmul.f32 %v1437, %v1434
    %v1439 = vmul.f32 %v1437, %v1435
    %v1440 = vadd.f32 %v1408, %v1438
    %v1441 = vadd.f32 %v1409, %v1439
    %s1442 = sld [smem:[#allocation9 + $0x5d]]
    %v1443 = vstv %s1442
    %v1444 = vmul.f32 %v1443, %v1434
    %v1445 = vmul.f32 %v1443, %v1435
    %v1446 = vadd.f32 %v1414, %v1444
    %v1447 = vadd.f32 %v1415, %v1445
    %s1448 = sld [smem:[#allocation9 + $0x5e]]
    %v1449 = vstv %s1448
    %v1450 = vmul.f32 %v1449, %v1434
    %v1451 = vmul.f32 %v1449, %v1435
    %v1452 = vadd.f32 %v1420, %v1450
    %v1453 = vadd.f32 %v1421, %v1451
    %s1454 = sld [smem:[#allocation9 + $0x5f]]
    %v1455 = vstv %s1454
    %v1456 = vmul.f32 %v1455, %v1434
    %v1457 = vmul.f32 %v1455, %v1435
    %v1458 = vadd.f32 %v1426, %v1456
    %v1459 = vadd.f32 %v1427, %v1457
    %1460 = vrot.lane.b32.xlu0 %v124, 113
    %v1461 = vpop.permute.xlu0 %1460
    %1462 = vrot.lane.b32.xlu0 %v125, 113
    %v1463 = vpop.permute.xlu0 %1462
    %v1464 = vsel %vm564, %v1461, %v1463
    %v1465 = vsel %vm564, %v1463, %v1461
    %v1466 = vmul.f32 %v1464, %v571
    %v1467 = vmul.f32 %v1465, %v575
    %s1468 = sld [smem:[#allocation9 + $0x6c]]
    %v1469 = vstv %s1468
    %v1470 = vmul.f32 %v1469, %v1466
    %v1471 = vmul.f32 %v1469, %v1467
    %v1472 = vadd.f32 %v1440, %v1470
    %v1473 = vadd.f32 %v1441, %v1471
    %s1474 = sld [smem:[#allocation9 + $0x6d]]
    %v1475 = vstv %s1474
    %v1476 = vmul.f32 %v1475, %v1466
    %v1477 = vmul.f32 %v1475, %v1467
    %v1478 = vadd.f32 %v1446, %v1476
    %v1479 = vadd.f32 %v1447, %v1477
    %s1480 = sld [smem:[#allocation9 + $0x6e]]
    %v1481 = vstv %s1480
    %v1482 = vmul.f32 %v1481, %v1466
    %v1483 = vmul.f32 %v1481, %v1467
    %v1484 = vadd.f32 %v1452, %v1482
    %v1485 = vadd.f32 %v1453, %v1483
    %s1486 = sld [smem:[#allocation9 + $0x6f]]
    %v1487 = vstv %s1486
    %v1488 = vmul.f32 %v1487, %v1466
    %v1489 = vmul.f32 %v1487, %v1467
    %v1490 = vadd.f32 %v1458, %v1488
    %v1491 = vadd.f32 %v1459, %v1489
    %1492 = vrot.lane.b32.xlu0 %v124, 112
    %v1493 = vpop.permute.xlu0 %1492
    %1494 = vrot.lane.b32.xlu0 %v125, 112
    %v1495 = vpop.permute.xlu0 %1494
    %v1496 = vsel %vm608, %v1493, %v1495
    %v1497 = vsel %vm608, %v1495, %v1493
    %v1498 = vmul.f32 %v1496, %v615
    %v1499 = vmul.f32 %v1497, %v619
    %s1500 = sld [smem:[#allocation9 + $0x7c]]
    %v1501 = vstv %s1500
    %v1502 = vmul.f32 %v1501, %v1498
    %v1503 = vmul.f32 %v1501, %v1499
    %v1504 = vadd.f32 %v1472, %v1502
    %v1505 = vadd.f32 %v1473, %v1503
    %s1506 = sld [smem:[#allocation9 + $0x7d]]
    %v1507 = vstv %s1506
    %v1508 = vmul.f32 %v1507, %v1498
    %v1509 = vmul.f32 %v1507, %v1499
    %v1510 = vadd.f32 %v1478, %v1508
    %v1511 = vadd.f32 %v1479, %v1509
    %s1512 = sld [smem:[#allocation9 + $0x7e]]
    %v1513 = vstv %s1512
    %v1514 = vmul.f32 %v1513, %v1498
    %v1515 = vmul.f32 %v1513, %v1499
    %v1516 = vadd.f32 %v1484, %v1514
    %v1517 = vadd.f32 %v1485, %v1515
    %s1518 = sld [smem:[#allocation9 + $0x7f]]
    %v1519 = vstv %s1518
    %v1520 = vmul.f32 %v1519, %v1498
    %v1521 = vmul.f32 %v1519, %v1499
    %v1522 = vadd.f32 %v1490, %v1520
    %v1523 = vadd.f32 %v1491, %v1521
    %1524 = vrot.lane.b32.xlu0 %v124, 111
    %v1525 = vpop.permute.xlu0 %1524
    %1526 = vrot.lane.b32.xlu0 %v125, 111
    %v1527 = vpop.permute.xlu0 %1526
    %v1528 = vsel %vm652, %v1525, %v1527
    %v1529 = vsel %vm652, %v1527, %v1525
    %v1530 = vmul.f32 %v1528, %v659
    %v1531 = vmul.f32 %v1529, %v663
    %s1532 = sld [smem:[#allocation9 + $0x8c]]
    %v1533 = vstv %s1532
    %v1534 = vmul.f32 %v1533, %v1530
    %v1535 = vmul.f32 %v1533, %v1531
    %v1536 = vadd.f32 %v1504, %v1534
    %v1537 = vadd.f32 %v1505, %v1535
    %s1538 = sld [smem:[#allocation9 + $0x8d]]
    %v1539 = vstv %s1538
    %v1540 = vmul.f32 %v1539, %v1530
    %v1541 = vmul.f32 %v1539, %v1531
    %v1542 = vadd.f32 %v1510, %v1540
    %v1543 = vadd.f32 %v1511, %v1541
    %s1544 = sld [smem:[#allocation9 + $0x8e]]
    %v1545 = vstv %s1544
    %v1546 = vmul.f32 %v1545, %v1530
    %v1547 = vmul.f32 %v1545, %v1531
    %v1548 = vadd.f32 %v1516, %v1546
    %v1549 = vadd.f32 %v1517, %v1547
    %s1550 = sld [smem:[#allocation9 + $0x8f]]
    %v1551 = vstv %s1550
    %v1552 = vmul.f32 %v1551, %v1530
    %v1553 = vmul.f32 %v1551, %v1531
    %v1554 = vadd.f32 %v1522, %v1552
    %v1555 = vadd.f32 %v1523, %v1553
    %v1556 = vmul.f32 %v313, %v1536
    %v1557 = vmul.f32 %v313, %v1537
    %v1558 = vadd.f32 %v1270, %v1556
    %v1559 = vadd.f32 %v1271, %v1557
    %v1560 = vmul.f32 %v313, %v1542
    %v1561 = vmul.f32 %v313, %v1543
    %v1562 = vadd.f32 %v1274, %v1560
    %v1563 = vadd.f32 %v1275, %v1561
    %v1564 = vmul.f32 %v313, %v1548
    %v1565 = vmul.f32 %v313, %v1549
    %v1566 = vadd.f32 %v1278, %v1564
    %v1567 = vadd.f32 %v1279, %v1565
    %v1568 = vmul.f32 %v313, %v1554
    %v1569 = vmul.f32 %v313, %v1555
    %v1570 = vadd.f32 %v1282, %v1568
    %v1571 = vadd.f32 %v1283, %v1569
    %s1572 = smul.addr %s115, 8
    %s1573 = scalar_lea.vmem %s8, %s1572
    %1574 = vst [vmem:[%s1573] sm:$0xff] %v1558
    %1575 = vst [vmem:[%s1573 + $0x8] sm:$0xff] %v1559
    %1576 = vst [vmem:[%s1573 + $0x10] sm:$0xff] %v1562
    %1577 = vst [vmem:[%s1573 + $0x18] sm:$0xff] %v1563
    %1578 = vst [vmem:[%s1573 + $0x20] sm:$0xff] %v1566
    %1579 = vst [vmem:[%s1573 + $0x28] sm:$0xff] %v1567
    %1580 = vst [vmem:[%s1573 + $0x30] sm:$0xff] %v1570
    %1581 = vst [vmem:[%s1573 + $0x38] sm:$0xff] %v1571
    // Predicated region
    $region58: #{se_layer_forward.1} parent=1 // pred_check
      _
    $region59: #{se_layer_forward.1} parent=1 // pred_check_branch
      %1583 = sbr.rel (0) target = $region61
    $region60: #{se_layer_forward.1} parent=1 // pred_region
      _
    $region61: #{se_layer_forward.1} parent=1 // pred_fallthru
      _
    // Predicated region
    $region62: #{se_layer_forward.1} parent=1 // pred_check
      _
    $region63: #{se_layer_forward.1} parent=1 // pred_check_branch
      %1585 = sbr.rel (0) target = $region65
    $region64: #{se_layer_forward.1} parent=1 // pred_region
      _
    $region65: #{se_layer_forward.1} parent=1 // pred_fallthru
      _
    %1586 = vsyncpa [#allocation3], 1
    %1587 = vsyncpa [#allocation5], 1
    %1588 = vsyncpa [#allocation8], 1
    %1589 = vsyncpa [#allocation11], 1

</llo_original>
